<compile_context>
chip_gen: v5e
topology: v5e:2x2
jax: 0.10.0
libtpu: 0.0.40
codegen_flags: <defaults>
</compile_context>

<pallas_src>
import numpy as np
import jax
import jax.numpy as jnp
from jax.experimental import pallas as pl
from jax.experimental.pallas import tpu as pltpu


# ---------------------------------------------------------------------------
# Pallas kernels
# ---------------------------------------------------------------------------
def _gemm_bias_relu_pool_kernel(p_ref, w_ref, b_ref, pool_ref, o_ref, op_ref):
    """conv-as-GEMM + bias + ReLU + fused 2x2/stride-2 average pool.

    p_ref    : (IB*HW, 9*Cin)  bf16  im2col patches for IB whole images
    w_ref    : (9*Cin, Cout)   bf16  conv weight as a GEMM matrix
    b_ref    : (1, Cout)       f32   bias
    pool_ref : (HoWo, HW)      bf16  per-image average-pool operator
    o_ref    : (IB*HW, Cout)   f32   conv+ReLU output (flattened spatial)
    op_ref   : (IB*HoWo, Cout) f32   pooled output   (flattened spatial)
    """
    hw = pool_ref.shape[1]
    howo = pool_ref.shape[0]
    ib = p_ref.shape[0] // hw          # whole images in this block (static)

    # Single large lane-dense MXU matmul (bf16 operands, f32 accumulation).
    y = jnp.dot(p_ref[...], w_ref[...], preferred_element_type=jnp.float32)
    y = jnp.maximum(y + b_ref[...], 0.0)
    o_ref[...] = y

    # Fused 2x2 average pool: per-image matmul with a constant pool operator.
    pool = pool_ref[...]
    yb = y.astype(jnp.bfloat16)
    for i in range(ib):                # static unroll; ib is small
        op_ref[i * howo:(i + 1) * howo, :] = jnp.dot(
            pool, yb[i * hw:(i + 1) * hw, :],
            preferred_element_type=jnp.float32)


def _gemm_bias_relu_kernel(p_ref, w_ref, b_ref, o_ref):
    """conv-as-GEMM + bias + ReLU (no pooling; last stage)."""
    y = jnp.dot(p_ref[...], w_ref[...], preferred_element_type=jnp.float32)
    o_ref[...] = jnp.maximum(y + b_ref[...], 0.0)


# ---------------------------------------------------------------------------
# Glue helpers
# ---------------------------------------------------------------------------
def _pool_operator(H, W):
    """(H/2*W/2, H*W) matrix: 2x2/stride-2 avg pool on a row-major (H, W) grid."""
    Ho, Wo = H // 2, W // 2
    P = np.zeros((Ho * Wo, H * W), np.float32)
    for i in range(Ho):
        for j in range(Wo):
            r = i * Wo + j
            for di in range(2):
                for dj in range(2):
                    P[r, (2 * i + di) * W + (2 * j + dj)] = 0.25
    return P


def _images_per_step(B, HW, K, Cout, max_block_bytes=2 << 20):
    """Whole images per grid step: big enough to amortize per-step pipeline
    overhead, small enough for double-buffered VMEM on v7x (64 MiB), and
    keeping >= 2 grid steps so the 'parallel' axis shards over 2 TensorCores."""
    best = 1
    for cand in range(1, B + 1):
        if B % cand:
            continue
        if B > 1 and (B // cand) < 2:
            continue
        blk_bytes = cand * HW * (2 * K + 4 * Cout) + cand * (HW // 4) * 4 * Cout
        if blk_bytes <= max_block_bytes:
            best = cand
    return best


def _conv3x3_relu(x, w, b, *, with_pool):
    """3x3 'same' conv + ReLU (+ optional fused 2x2 avg pool) on NHWC input.

    x : (B, H, W, Cin) f32    w : (Cout, Cin, 3, 3)    b : (Cout,)
    Returns (conv_out (B,H,W,Cout) f32, pooled (B,H/2,W/2,Cout) f32 or None).
    """
    B, H, W, Cin = x.shape
    Cout = int(w.shape[0])
    K = 9 * Cin
    HW = H * W

    # im2col in glue -> the kernel body is a single lane-dense (M, K) GEMM.
    xp = jnp.pad(x, ((0, 0), (1, 1), (1, 1), (0, 0)))
    cols = [xp[:, dy:dy + H, dx:dx + W, :]
            for dy in range(3) for dx in range(3)]
    patches = (jnp.concatenate(cols, axis=-1)
               .reshape(B * HW, K).astype(jnp.bfloat16))

    # Weight -> (9*Cin, Cout) GEMM operand; bf16 single-pass MXU operands.
    w_gemm = (jnp.transpose(w, (2, 3, 1, 0))
              .reshape(K, Cout).astype(jnp.bfloat16))
    b2d = b.reshape(1, Cout).astype(jnp.float32)

    ib = _images_per_step(B, HW, K, Cout)
    grid = (B // ib,)
    cparams = pltpu.CompilerParams(dimension_semantics=("parallel",))

    if with_pool:
        Ho, Wo = H // 2, W // 2
        howo = Ho * Wo
        pool_op = jnp.asarray(_pool_operator(H, W), dtype=jnp.bfloat16)
        out_flat, pooled_flat = pl.pallas_call(
            _gemm_bias_relu_pool_kernel,
            out_shape=(jax.ShapeDtypeStruct((B * HW, Cout), jnp.float32),
                       jax.ShapeDtypeStruct((B * howo, Cout), jnp.float32)),
            grid=grid,
            in_specs=[
                pl.BlockSpec((ib * HW, K), lambda g: (g, 0)),
                pl.BlockSpec((K, Cout), lambda g: (0, 0)),
                pl.BlockSpec((1, Cout), lambda g: (0, 0)),
                pl.BlockSpec((howo, HW), lambda g: (0, 0)),
            ],
            out_specs=(pl.BlockSpec((ib * HW, Cout), lambda g: (g, 0)),
                       pl.BlockSpec((ib * howo, Cout), lambda g: (g, 0))),
            compiler_params=cparams,
        )(patches, w_gemm, b2d, pool_op)
        return (out_flat.reshape(B, H, W, Cout),
                pooled_flat.reshape(B, Ho, Wo, Cout))

    out_flat = pl.pallas_call(
        _gemm_bias_relu_kernel,
        out_shape=jax.ShapeDtypeStruct((B * HW, Cout), jnp.float32),
        grid=grid,
        in_specs=[
            pl.BlockSpec((ib * HW, K), lambda g: (g, 0)),
            pl.BlockSpec((K, Cout), lambda g: (0, 0)),
            pl.BlockSpec((1, Cout), lambda g: (0, 0)),
        ],
        out_specs=pl.BlockSpec((ib * HW, Cout), lambda g: (g, 0)),
        compiler_params=cparams,
    )(patches, w_gemm, b2d)
    return out_flat.reshape(B, H, W, Cout), None


def encoding_c0(x_nchw, params):
    """Pallas forward pass of Encoding_C0.

    x_nchw : (B, 32, H, W) float32, PyTorch NCHW layout (H, W divisible by 4).
    params : dict with PyTorch-layout weights w1/b1, w2/b2, w3/b3.
    Returns (E1, E3, E5) in NCHW, matching the torch module's forward().
    Internally everything runs channel-last (lane-dense) on the TPU.
    """
    x = jnp.transpose(x_nchw, (0, 2, 3, 1))            # NCHW -> NHWC
    e1, e1p = _conv3x3_relu(x, params["w1"], params["b1"], with_pool=True)
    e3, e3p = _conv3x3_relu(e1p, params["w2"], params["b2"], with_pool=True)
    e5, _ = _conv3x3_relu(e3p, params["w3"], params["b3"], with_pool=False)
    to_nchw = lambda t: jnp.transpose(t, (0, 3, 1, 2))
    return to_nchw(e1), to_nchw(e3), to_nchw(e5)


# ---------------------------------------------------------------------------
# Self-test
# ---------------------------------------------------------------------------
if __name__ == "__main__":
    B, Cin, H, W = 2, 32, 16, 16

    key = jax.random.PRNGKey(0)
    kx, kp = jax.random.split(key)

    def bf16_exact(v):
        # Keep values exactly representable in bf16 so the single-pass bf16
        # MXU path stays tightly comparable to the float64 reference.
        return v.astype(jnp.bfloat16).astype(jnp.float32)

    x = bf16_exact(jax.random.normal(kx, (B, Cin, H, W), dtype=jnp.float32))

    kw1, kb1, kw2, kb2, kw3, kb3 = jax.random.split(kp, 6)
    params = {
        "w1": bf16_exact(0.05 * jax.random.normal(kw1, (64, 32, 3, 3), jnp.float32)),
        "b1": bf16_exact(0.05 * jax.random.normal(kb1, (64,), jnp.float32)),
        "w2": bf16_exact(0.05 * jax.random.normal(kw2, (128, 64, 3, 3), jnp.float32)),
        "b2": bf16_exact(0.05 * jax.random.normal(kb2, (128,), jnp.float32)),
        "w3": bf16_exact(0.05 * jax.random.normal(kw3, (128, 128, 3, 3), jnp.float32)),
        "b3": bf16_exact(0.05 * jax.random.normal(kb3, (128,), jnp.float32)),
    }

    fwd = jax.jit(encoding_c0)
    e1, e3, e5 = fwd(x, params)
    e1, e3, e5 = jax.block_until_ready((e1, e3, e5))

    # ---- float64 numpy reference of the torch module ----
    def ref_conv_relu(inp, w, b):
        Bq, Ci, Hq, Wq = inp.shape
        w64 = np.asarray(w, np.float64)
        b64 = np.asarray(b, np.float64)
        xp = np.pad(inp, ((0, 0), (0, 0), (1, 1), (1, 1)))
        out = np.zeros((Bq, w64.shape[0], Hq, Wq), np.float64)
        for dy in range(3):
            for dx in range(3):
                out += np.einsum("bchw,oc->bohw",
                                 xp[:, :, dy:dy + Hq, dx:dx + Wq],
                                 w64[:, :, dy, dx])
        out += b64[None, :, None, None]
        return np.maximum(out, 0.0)

    def ref_avgpool2(t):
        return 0.25 * (t[:, :, 0::2, 0::2] + t[:, :, 0::2, 1::2]
                       + t[:, :, 1::2, 0::2] + t[:, :, 1::2, 1::2])

    xn = np.asarray(x, dtype=np.float64)
    r1 = ref_conv_relu(xn, params["w1"], params["b1"])
    r3 = ref_conv_relu(ref_avgpool2(r1), params["w2"], params["b2"])
    r5 = ref_conv_relu(ref_avgpool2(r3), params["w3"], params["b3"])

    assert e1.shape == (B, 64, H, W)
    assert e3.shape == (B, 128, H // 2, W // 2)
    assert e5.shape == (B, 128, H // 4, W // 4)

    # Stage-1 operands are exactly bf16-representable -> near-exact result.
    np.testing.assert_allclose(np.asarray(e1), r1, rtol=1e-3, atol=1e-3)
    # Stages 2/3 quantize intermediate activations to bf16 for the single-pass
    # MXU path (per the performance feedback), so tolerance is slightly looser.
    np.testing.assert_allclose(np.asarray(e3), r3, rtol=2e-2, atol=2e-2)
    np.testing.assert_allclose(np.asarray(e5), r5, rtol=2e-2, atol=2e-2)

    print("KERNEL_OK")
</pallas_src>

<mosaic_0001>
module attributes {stable_mosaic.version = 11 : i64} {
  func.func @_gemm_bias_relu_pool_kernel(%arg0: i32, %arg1: memref<256x288xbf16, #tpu.memory_space<vmem>>, %arg2: memref<288x64xbf16, #tpu.memory_space<vmem>>, %arg3: memref<1x64xf32, #tpu.memory_space<vmem>>, %arg4: memref<64x256xbf16, #tpu.memory_space<vmem>>, %arg5: memref<256x64xf32, #tpu.memory_space<vmem>>, %arg6: memref<64x64xf32, #tpu.memory_space<vmem>>) attributes {dimension_semantics = [#tpu.dimension_semantics<parallel>], iteration_bounds = array<i64: 2>, scalar_prefetch = 0 : i64, scratch_operands = 0 : i64, tpu.core_type = #tpu.core_type<tc>, window_params = [{transform_indices = @transform_0, window_bounds = array<i64: 256, 288>}, {pipeline_mode = #tpu.pipeline_mode<synchronous>, transform_indices = @transform_1, window_bounds = array<i64: 288, 64>}, {pipeline_mode = #tpu.pipeline_mode<synchronous>, transform_indices = @transform_2, window_bounds = array<i64: 1, 64>}, {pipeline_mode = #tpu.pipeline_mode<synchronous>, transform_indices = @transform_3, window_bounds = array<i64: 64, 256>}, {transform_indices = @transform_4, window_bounds = array<i64: 256, 64>}, {transform_indices = @transform_5, window_bounds = array<i64: 64, 64>}]} {
    %c0 = arith.constant 0 : index
    %c0_0 = arith.constant 0 : index
    %0 = vector.load %arg1[%c0, %c0_0] : memref<256x288xbf16, #tpu.memory_space<vmem>>, vector<256x288xbf16>
    %c0_1 = arith.constant 0 : index
    %c0_2 = arith.constant 0 : index
    %1 = vector.load %arg2[%c0_1, %c0_2] : memref<288x64xbf16, #tpu.memory_space<vmem>>, vector<288x64xbf16>
    %cst = arith.constant dense<0.000000e+00> : vector<256x64xf32>
    %2 = tpu.matmul %0, %1, %cst {dimension_numbers = #tpu.dot_dimension_numbers<[1], [0], [0], [1], [0, 0, 1, 1], [], []>} : vector<256x288xbf16>, vector<288x64xbf16>, vector<256x64xf32> -> vector<256x64xf32>
    %c0_3 = arith.constant 0 : index
    %c0_4 = arith.constant 0 : index
    %3 = vector.load %arg3[%c0_3, %c0_4] : memref<1x64xf32, #tpu.memory_space<vmem>>, vector<1x64xf32>
    %4 = vector.broadcast %3 : vector<1x64xf32> to vector<256x64xf32>
    %5 = arith.addf %2, %4 : vector<256x64xf32>
    %cst_5 = arith.constant 0.000000e+00 : f32
    %6 = vector.broadcast %cst_5 : f32 to vector<256x64xf32>
    %7 = arith.maximumf %5, %6 : vector<256x64xf32>
    %c0_6 = arith.constant 0 : index
    %c0_7 = arith.constant 0 : index
    %8 = vector.load %arg5[%c0_6, %c0_7] : memref<256x64xf32, #tpu.memory_space<vmem>>, vector<256x64xf32>
    tpu.vector_store %arg5[%c0_6, %c0_7], %7 {strides = array<i32>} : memref<256x64xf32, #tpu.memory_space<vmem>>, vector<256x64xf32>,
    %c0_8 = arith.constant 0 : index
    %c0_9 = arith.constant 0 : index
    %9 = vector.load %arg4[%c0_8, %c0_9] : memref<64x256xbf16, #tpu.memory_space<vmem>>, vector<64x256xbf16>
    %10 = arith.truncf %7 : vector<256x64xf32> to vector<256x64xbf16>
    %cst_10 = arith.constant dense<0.000000e+00> : vector<64x64xf32>
    %11 = tpu.matmul %9, %10, %cst_10 {dimension_numbers = #tpu.dot_dimension_numbers<[1], [0], [0], [1], [0, 0, 1, 1], [], []>} : vector<64x256xbf16>, vector<256x64xbf16>, vector<64x64xf32> -> vector<64x64xf32>
    %c0_11 = arith.constant 0 : index
    %c0_12 = arith.constant 0 : index
    %12 = vector.load %arg6[%c0_11, %c0_12] : memref<64x64xf32, #tpu.memory_space<vmem>>, vector<64x64xf32>
    tpu.vector_store %arg6[%c0_11, %c0_12], %11 {strides = array<i32>} : memref<64x64xf32, #tpu.memory_space<vmem>>, vector<64x64xf32>,
    return
  }
  func.func @transform_0(%arg0: i32) -> (i32, i32) {
    %c0_i32 = arith.constant 0 : i32
    %c0_i32_0 = arith.constant 0 : i32
    return %arg0, %c0_i32 : i32, i32
  }
  func.func @transform_1(%arg0: i32) -> (i32, i32) {
    %c0_i32 = arith.constant 0 : i32
    %c0_i32_0 = arith.constant 0 : i32
    %c0_i32_1 = arith.constant 0 : i32
    return %c0_i32, %c0_i32_0 : i32, i32
  }
  func.func @transform_2(%arg0: i32) -> (i32, i32) {
    %c0_i32 = arith.constant 0 : i32
    %c0_i32_0 = arith.constant 0 : i32
    %c0_i32_1 = arith.constant 0 : i32
    return %c0_i32, %c0_i32_0 : i32, i32
  }
  func.func @transform_3(%arg0: i32) -> (i32, i32) {
    %c0_i32 = arith.constant 0 : i32
    %c0_i32_0 = arith.constant 0 : i32
    %c0_i32_1 = arith.constant 0 : i32
    return %c0_i32, %c0_i32_0 : i32, i32
  }
  func.func @transform_4(%arg0: i32) -> (i32, i32) {
    %c0_i32 = arith.constant 0 : i32
    %c0_i32_0 = arith.constant 0 : i32
    return %arg0, %c0_i32 : i32, i32
  }
  func.func @transform_5(%arg0: i32) -> (i32, i32) {
    %c0_i32 = arith.constant 0 : i32
    %c0_i32_0 = arith.constant 0 : i32
    return %arg0, %c0_i32 : i32, i32
  }
}

module attributes {stable_mosaic.version = 11 : i64} {
  func.func @_gemm_bias_relu_pool_kernel(%arg0: i32, %arg1: memref<64x576xbf16, #tpu.memory_space<vmem>>, %arg2: memref<576x128xbf16, #tpu.memory_space<vmem>>, %arg3: memref<1x128xf32, #tpu.memory_space<vmem>>, %arg4: memref<16x64xbf16, #tpu.memory_space<vmem>>, %arg5: memref<64x128xf32, #tpu.memory_space<vmem>>, %arg6: memref<16x128xf32, #tpu.memory_space<vmem>>) attributes {dimension_semantics = [#tpu.dimension_semantics<parallel>], iteration_bounds = array<i64: 2>, scalar_prefetch = 0 : i64, scratch_operands = 0 : i64, tpu.core_type = #tpu.core_type<tc>, window_params = [{transform_indices = @transform_0, window_bounds = array<i64: 64, 576>}, {pipeline_mode = #tpu.pipeline_mode<synchronous>, transform_indices = @transform_1, window_bounds = array<i64: 576, 128>}, {pipeline_mode = #tpu.pipeline_mode<synchronous>, transform_indices = @transform_2, window_bounds = array<i64: 1, 128>}, {pipeline_mode = #tpu.pipeline_mode<synchronous>, transform_indices = @transform_3, window_bounds = array<i64: 16, 64>}, {transform_indices = @transform_4, window_bounds = array<i64: 64, 128>}, {transform_indices = @transform_5, window_bounds = array<i64: 16, 128>}]} {
    %c0 = arith.constant 0 : index
    %c0_0 = arith.constant 0 : index
    %0 = vector.load %arg1[%c0, %c0_0] : memref<64x576xbf16, #tpu.memory_space<vmem>>, vector<64x576xbf16>
    %c0_1 = arith.constant 0 : index
    %c0_2 = arith.constant 0 : index
    %1 = vector.load %arg2[%c0_1, %c0_2] : memref<576x128xbf16, #tpu.memory_space<vmem>>, vector<576x128xbf16>
    %cst = arith.constant dense<0.000000e+00> : vector<64x128xf32>
    %2 = tpu.matmul %0, %1, %cst {dimension_numbers = #tpu.dot_dimension_numbers<[1], [0], [0], [1], [0, 0, 1, 1], [], []>} : vector<64x576xbf16>, vector<576x128xbf16>, vector<64x128xf32> -> vector<64x128xf32>
    %c0_3 = arith.constant 0 : index
    %c0_4 = arith.constant 0 : index
    %3 = vector.load %arg3[%c0_3, %c0_4] : memref<1x128xf32, #tpu.memory_space<vmem>>, vector<1x128xf32>
    %4 = vector.broadcast %3 : vector<1x128xf32> to vector<64x128xf32>
    %5 = arith.addf %2, %4 : vector<64x128xf32>
    %cst_5 = arith.constant 0.000000e+00 : f32
    %6 = vector.broadcast %cst_5 : f32 to vector<64x128xf32>
    %7 = arith.maximumf %5, %6 : vector<64x128xf32>
    %c0_6 = arith.constant 0 : index
    %c0_7 = arith.constant 0 : index
    %8 = vector.load %arg5[%c0_6, %c0_7] : memref<64x128xf32, #tpu.memory_space<vmem>>, vector<64x128xf32>
    tpu.vector_store %arg5[%c0_6, %c0_7], %7 {strides = array<i32>} : memref<64x128xf32, #tpu.memory_space<vmem>>, vector<64x128xf32>,
    %c0_8 = arith.constant 0 : index
    %c0_9 = arith.constant 0 : index
    %9 = vector.load %arg4[%c0_8, %c0_9] : memref<16x64xbf16, #tpu.memory_space<vmem>>, vector<16x64xbf16>
    %10 = arith.truncf %7 : vector<64x128xf32> to vector<64x128xbf16>
    %cst_10 = arith.constant dense<0.000000e+00> : vector<16x128xf32>
    %11 = tpu.matmul %9, %10, %cst_10 {dimension_numbers = #tpu.dot_dimension_numbers<[1], [0], [0], [1], [0, 0, 1, 1], [], []>} : vector<16x64xbf16>, vector<64x128xbf16>, vector<16x128xf32> -> vector<16x128xf32>
    %c0_11 = arith.constant 0 : index
    %c0_12 = arith.constant 0 : index
    %12 = vector.load %arg6[%c0_11, %c0_12] : memref<16x128xf32, #tpu.memory_space<vmem>>, vector<16x128xf32>
    tpu.vector_store %arg6[%c0_11, %c0_12], %11 {strides = array<i32>} : memref<16x128xf32, #tpu.memory_space<vmem>>, vector<16x128xf32>,
    return
  }
  func.func @transform_0(%arg0: i32) -> (i32, i32) {
    %c0_i32 = arith.constant 0 : i32
    %c0_i32_0 = arith.constant 0 : i32
    return %arg0, %c0_i32 : i32, i32
  }
  func.func @transform_1(%arg0: i32) -> (i32, i32) {
    %c0_i32 = arith.constant 0 : i32
    %c0_i32_0 = arith.constant 0 : i32
    %c0_i32_1 = arith.constant 0 : i32
    return %c0_i32, %c0_i32_0 : i32, i32
  }
  func.func @transform_2(%arg0: i32) -> (i32, i32) {
    %c0_i32 = arith.constant 0 : i32
    %c0_i32_0 = arith.constant 0 : i32
    %c0_i32_1 = arith.constant 0 : i32
    return %c0_i32, %c0_i32_0 : i32, i32
  }
  func.func @transform_3(%arg0: i32) -> (i32, i32) {
    %c0_i32 = arith.constant 0 : i32
    %c0_i32_0 = arith.constant 0 : i32
    %c0_i32_1 = arith.constant 0 : i32
    return %c0_i32, %c0_i32_0 : i32, i32
  }
  func.func @transform_4(%arg0: i32) -> (i32, i32) {
    %c0_i32 = arith.constant 0 : i32
    %c0_i32_0 = arith.constant 0 : i32
    return %arg0, %c0_i32 : i32, i32
  }
  func.func @transform_5(%arg0: i32) -> (i32, i32) {
    %c0_i32 = arith.constant 0 : i32
    %c0_i32_0 = arith.constant 0 : i32
    return %arg0, %c0_i32 : i32, i32
  }
}

module attributes {stable_mosaic.version = 11 : i64} {
  func.func @_gemm_bias_relu_kernel(%arg0: i32, %arg1: memref<16x1152xbf16, #tpu.memory_space<vmem>>, %arg2: memref<1152x128xbf16, #tpu.memory_space<vmem>>, %arg3: memref<1x128xf32, #tpu.memory_space<vmem>>, %arg4: memref<16x128xf32, #tpu.memory_space<vmem>>) attributes {dimension_semantics = [#tpu.dimension_semantics<parallel>], iteration_bounds = array<i64: 2>, scalar_prefetch = 0 : i64, scratch_operands = 0 : i64, tpu.core_type = #tpu.core_type<tc>, window_params = [{transform_indices = @transform_0, window_bounds = array<i64: 16, 1152>}, {pipeline_mode = #tpu.pipeline_mode<synchronous>, transform_indices = @transform_1, window_bounds = array<i64: 1152, 128>}, {pipeline_mode = #tpu.pipeline_mode<synchronous>, transform_indices = @transform_2, window_bounds = array<i64: 1, 128>}, {transform_indices = @transform_3, window_bounds = array<i64: 16, 128>}]} {
    %c0 = arith.constant 0 : index
    %c0_0 = arith.constant 0 : index
    %0 = vector.load %arg1[%c0, %c0_0] : memref<16x1152xbf16, #tpu.memory_space<vmem>>, vector<16x1152xbf16>
    %c0_1 = arith.constant 0 : index
    %c0_2 = arith.constant 0 : index
    %1 = vector.load %arg2[%c0_1, %c0_2] : memref<1152x128xbf16, #tpu.memory_space<vmem>>, vector<1152x128xbf16>
    %cst = arith.constant dense<0.000000e+00> : vector<16x128xf32>
    %2 = tpu.matmul %0, %1, %cst {dimension_numbers = #tpu.dot_dimension_numbers<[1], [0], [0], [1], [0, 0, 1, 1], [], []>} : vector<16x1152xbf16>, vector<1152x128xbf16>, vector<16x128xf32> -> vector<16x128xf32>
    %c0_3 = arith.constant 0 : index
    %c0_4 = arith.constant 0 : index
    %3 = vector.load %arg3[%c0_3, %c0_4] : memref<1x128xf32, #tpu.memory_space<vmem>>, vector<1x128xf32>
    %4 = vector.broadcast %3 : vector<1x128xf32> to vector<16x128xf32>
    %5 = arith.addf %2, %4 : vector<16x128xf32>
    %cst_5 = arith.constant 0.000000e+00 : f32
    %6 = vector.broadcast %cst_5 : f32 to vector<16x128xf32>
    %7 = arith.maximumf %5, %6 : vector<16x128xf32>
    %c0_6 = arith.constant 0 : index
    %c0_7 = arith.constant 0 : index
    %8 = vector.load %arg4[%c0_6, %c0_7] : memref<16x128xf32, #tpu.memory_space<vmem>>, vector<16x128xf32>
    tpu.vector_store %arg4[%c0_6, %c0_7], %7 {strides = array<i32>} : memref<16x128xf32, #tpu.memory_space<vmem>>, vector<16x128xf32>,
    return
  }
  func.func @transform_0(%arg0: i32) -> (i32, i32) {
    %c0_i32 = arith.constant 0 : i32
    %c0_i32_0 = arith.constant 0 : i32
    return %arg0, %c0_i32 : i32, i32
  }
  func.func @transform_1(%arg0: i32) -> (i32, i32) {
    %c0_i32 = arith.constant 0 : i32
    %c0_i32_0 = arith.constant 0 : i32
    %c0_i32_1 = arith.constant 0 : i32
    return %c0_i32, %c0_i32_0 : i32, i32
  }
  func.func @transform_2(%arg0: i32) -> (i32, i32) {
    %c0_i32 = arith.constant 0 : i32
    %c0_i32_0 = arith.constant 0 : i32
    %c0_i32_1 = arith.constant 0 : i32
    return %c0_i32, %c0_i32_0 : i32, i32
  }
  func.func @transform_3(%arg0: i32) -> (i32, i32) {
    %c0_i32 = arith.constant 0 : i32
    %c0_i32_0 = arith.constant 0 : i32
    return %arg0, %c0_i32 : i32, i32
  }
}

</mosaic_0001>

<llo_original>
// kernel: encoding_c0.3
$region0: #{encoding_c0.3}
  #allocation0 [shape = 'u32[]', space=smem, size = 0x4, offset = 0x4, fixed_abs, tag = 'smem constant byte address 0x4 - core index']
  #allocation1 [shape = 'u32[72,128]{1,0:T(1,128)}', space=vmem, size = 0x9000, scoped, tag = 'internal scratch']
  %s0 = inlined_call_operand.vmem [shape: bf16[512,288], index: 0, kind: input, shape index: {}]
  %s1 = inlined_call_operand.vmem [shape: bf16[288,64], index: 1, kind: input, shape index: {}]
  %s2 = inlined_call_operand.vmem [shape: f32[1,64], index: 2, kind: input, shape index: {}]
  %s3 = inlined_call_operand.vmem [shape: bf16[64,256], index: 3, kind: input, shape index: {}]
  %s4 = inlined_call_operand.hbm [shape: f32[512,64], index: 4, kind: output, shape index: {0}]
  %s5 = inlined_call_operand.vmem [shape: f32[128,64], index: 5, kind: output, shape index: {1}]
  %6 = xla_tuple %s4, %s5
  %s7 = sld [smem:[#allocation0]]
  $region57: #{encoding_c0.3} parent=0
    _
  %s9 = ssub.s32 1, %s7
  %s10 = scalar_select 0, %s9, %s7
  $region1: #{encoding_c0.3} parent=0
    #allocation2 [shape = 'u8[262144]{0}', space=vmem, size = 0x40000, scoped, tag = 'output window, operand 0']
    #allocation3 [shape = 's32[2]{0}', space=sflag, size = 0x8, scoped, tag = 'scoped memory for encoding_c0.3']
    %11 = vsyncpa [#allocation3], 0
    %s12 = scalar_lea.sflag [#allocation3], 1
    %13 = vsyncpa %s12, 0
    loop: start=0, step=1, limit=4
    $region2: #{encoding_c0.3} parent=1 // loop_pre_header
      _
    $region3: #{encoding_c0.3} parent=1 // loop_header
      %s15 = sphi 0, %s19
      %p16 = scmp.ge.s32.totalorder %s15, 4
      %s25 = sphi 0, %s27
      %s28 = sphi 0, %s25
      %s29 = sphi 0, %s28
      %s45 = sphi 0, %s29
      %s49 = sphi 0, %s49
      %s51 = sphi 0, %s49
      %s52 = sphi 0, %s51
      %s66 = sphi 0, %s52
      %s70 = sphi 0, %s70
      %s72 = sphi 0, %s70
      %s73 = sphi 0, %s72
      %s87 = sphi 0, %s73
      %s91 = sphi 0, %s91
      %s93 = sphi 0, %s91
      %s94 = sphi 0, %s93
      %s108 = sphi 0, %s94
      %s114 = sphi 0, %s116
      %s117 = sphi 0, %s114
      %s118 = sphi 0, %s117
      %s134 = sphi 0, %s118
      %s140 = sphi 0, %s142
      %s143 = sphi 0, %s140
      %s144 = sphi 0, %s143
      %s160 = sphi 0, %s144
    $region4: #{encoding_c0.3} parent=1 // loop_header_branch
      %18 = sbr.rel (%p16) target = $region8
    $region5: #{encoding_c0.3} parent=1 // loop_body
      %s20 = ssub.s32 %s15, 1
      %s21 = ssub.s32 %s15, 2
      %s22 = sadd.s32 %s15, 1
      %s23 = ssub.s32 %s15, %s22
      %p24 = scmp.eq.s32.totalorder %s23, 0
      %s26 = sadd.s32 %s25, 1
      %s27 = scalar_select %p24, %s25, %s26
      %p30 = pneg %p24
      %p31 = scmp.eq.s32.totalorder %s15, 1
      %p32 = por %p30, %p31
      %p33 = scmp.ne.s32.totalorder %s25, %s28
      %p34 = scmp.eq.s32.totalorder %s15, 0
      %p35 = por %p33, %p34
      %p36 = scmp.ne.s32.totalorder %s25, %s28
      %p37 = scmp.eq.s32.totalorder %s20, 1
      %p38 = por %p36, %p37
      %p39 = scmp.ne.s32.totalorder %s28, %s29
      %p40 = scmp.eq.s32.totalorder %s20, 0
      %p41 = por %p39, %p40
      %p42 = scmp.ne.s32.totalorder %s28, %s29
      %p43 = scmp.eq.s32.totalorder %s21, 1
      %p44 = por %p42, %p43
      %p46 = scmp.ne.s32.totalorder %s29, %s45
      %p47 = scmp.eq.s32.totalorder %s21, 0
      %p48 = por %p46, %p47
      %s50 = sadd.s32 %s49, 1
      %p53 = scmp.eq.s32.totalorder %s15, 1
      %p54 = scmp.ne.s32.totalorder %s49, %s51
      %p55 = scmp.eq.s32.totalorder %s15, 0
      %p56 = por %p54, %p55
      %p57 = scmp.ne.s32.totalorder %s49, %s51
      %p58 = scmp.eq.s32.totalorder %s20, 1
      %p59 = por %p57, %p58
      %p60 = scmp.ne.s32.totalorder %s51, %s52
      %p61 = scmp.eq.s32.totalorder %s20, 0
      %p62 = por %p60, %p61
      %p63 = scmp.ne.s32.totalorder %s51, %s52
      %p64 = scmp.eq.s32.totalorder %s21, 1
      %p65 = por %p63, %p64
      %p67 = scmp.ne.s32.totalorder %s52, %s66
      %p68 = scmp.eq.s32.totalorder %s21, 0
      %p69 = por %p67, %p68
      %s71 = sadd.s32 %s70, 1
      %p74 = scmp.eq.s32.totalorder %s15, 1
      %p75 = scmp.ne.s32.totalorder %s70, %s72
      %p76 = scmp.eq.s32.totalorder %s15, 0
      %p77 = por %p75, %p76
      %p78 = scmp.ne.s32.totalorder %s70, %s72
      %p79 = scmp.eq.s32.totalorder %s20, 1
      %p80 = por %p78, %p79
      %p81 = scmp.ne.s32.totalorder %s72, %s73
      %p82 = scmp.eq.s32.totalorder %s20, 0
      %p83 = por %p81, %p82
      %p84 = scmp.ne.s32.totalorder %s72, %s73
      %p85 = scmp.eq.s32.totalorder %s21, 1
      %p86 = por %p84, %p85
      %p88 = scmp.ne.s32.totalorder %s73, %s87
      %p89 = scmp.eq.s32.totalorder %s21, 0
      %p90 = por %p88, %p89
      %s92 = sadd.s32 %s91, 1
      %p95 = scmp.eq.s32.totalorder %s15, 1
      %p96 = scmp.ne.s32.totalorder %s91, %s93
      %p97 = scmp.eq.s32.totalorder %s15, 0
      %p98 = por %p96, %p97
      %p99 = scmp.ne.s32.totalorder %s91, %s93
      %p100 = scmp.eq.s32.totalorder %s20, 1
      %p101 = por %p99, %p100
      %p102 = scmp.ne.s32.totalorder %s93, %s94
      %p103 = scmp.eq.s32.totalorder %s20, 0
      %p104 = por %p102, %p103
      %p105 = scmp.ne.s32.totalorder %s93, %s94
      %p106 = scmp.eq.s32.totalorder %s21, 1
      %p107 = por %p105, %p106
      %p109 = scmp.ne.s32.totalorder %s94, %s108
      %p110 = scmp.eq.s32.totalorder %s21, 0
      %p111 = por %p109, %p110
      %s112 = ssub.s32 %s15, %s22
      %p113 = scmp.eq.s32.totalorder %s112, 0
      %s115 = sadd.s32 %s114, 1
      %s116 = scalar_select %p113, %s114, %s115
      %p119 = pneg %p113
      %p120 = scmp.eq.s32.totalorder %s15, 1
      %p121 = por %p119, %p120
      %p122 = scmp.ne.s32.totalorder %s114, %s117
      %p123 = scmp.eq.s32.totalorder %s15, 0
      %p124 = por %p122, %p123
      %p125 = scmp.ne.s32.totalorder %s114, %s117
      %p126 = scmp.eq.s32.totalorder %s20, 1
      %p127 = por %p125, %p126
      %p128 = scmp.ne.s32.totalorder %s117, %s118
      %p129 = scmp.eq.s32.totalorder %s20, 0
      %p130 = por %p128, %p129
      %p131 = scmp.ne.s32.totalorder %s117, %s118
      %p132 = scmp.eq.s32.totalorder %s21, 1
      %p133 = por %p131, %p132
      %p135 = scmp.ne.s32.totalorder %s118, %s134
      %p136 = scmp.eq.s32.totalorder %s21, 0
      %p137 = por %p135, %p136
      %s138 = ssub.s32 %s15, %s22
      %p139 = scmp.eq.s32.totalorder %s138, 0
      %s141 = sadd.s32 %s140, 1
      %s142 = scalar_select %p139, %s140, %s141
      %p145 = pneg %p139
      %p146 = scmp.eq.s32.totalorder %s15, 1
      %p147 = por %p145, %p146
      %p148 = scmp.ne.s32.totalorder %s140, %s143
      %p149 = scmp.eq.s32.totalorder %s15, 0
      %p150 = por %p148, %p149
      %p151 = scmp.ne.s32.totalorder %s140, %s143
      %p152 = scmp.eq.s32.totalorder %s20, 1
      %p153 = por %p151, %p152
      %p154 = scmp.ne.s32.totalorder %s143, %s144
      %p155 = scmp.eq.s32.totalorder %s20, 0
      %p156 = por %p154, %p155
      %p157 = scmp.ne.s32.totalorder %s143, %s144
      %p158 = scmp.eq.s32.totalorder %s21, 1
      %p159 = por %p157, %p158
      %p161 = scmp.ne.s32.totalorder %s144, %s160
      %p162 = scmp.eq.s32.totalorder %s21, 0
      %p163 = por %p161, %p162
      %p164 = scmp.le.s32.totalorder 1, %s15
      %p165 = scmp.lt.s32.totalorder %s15, 3
      %p166 = pnand %p164, %p165
      %p167 = pneg %p166
      // Predicated region
      $region9: #{encoding_c0.3} parent=5 // pred_check
        _
      $region10: #{encoding_c0.3} parent=5 // pred_check_branch
        %169 = sbr.rel (%p166) target = $region12
      $region11: #{encoding_c0.3} parent=5 // pred_region
        %s170 = ssub.s32 %s15, 1
        // Predicated region
        $region13: #{encoding_c0.3} parent=11 // pred_check
          %p171 = pneg %p62
        $region14: #{encoding_c0.3} parent=11 // pred_check_branch
          %173 = sbr.rel (%p171) target = $region16
        $region15: #{encoding_c0.3} parent=11 // pred_region
          _
        $region16: #{encoding_c0.3} parent=11 // pred_fallthru
          _
        // Predicated region
        $region17: #{encoding_c0.3} parent=11 // pred_check
          %p174 = pneg %p83
        $region18: #{encoding_c0.3} parent=11 // pred_check_branch
          %176 = sbr.rel (%p174) target = $region20
        $region19: #{encoding_c0.3} parent=11 // pred_region
          _
        $region20: #{encoding_c0.3} parent=11 // pred_fallthru
          _
        // Predicated region
        $region21: #{encoding_c0.3} parent=11 // pred_check
          %p177 = pneg %p104
        $region22: #{encoding_c0.3} parent=11 // pred_check_branch
          %179 = sbr.rel (%p177) target = $region24
        $region23: #{encoding_c0.3} parent=11 // pred_region
          _
        $region24: #{encoding_c0.3} parent=11 // pred_fallthru
          _
      $region12: #{encoding_c0.3} parent=5 // pred_fallthru
        _
      %p180 = scmp.lt.s32.totalorder %s15, 2
      // Predicated region
      $region25: #{encoding_c0.3} parent=5 // pred_check
        %p181 = pneg %p180
      $region26: #{encoding_c0.3} parent=5 // pred_check_branch
        %183 = sbr.rel (%p181) target = $region28
      $region27: #{encoding_c0.3} parent=5 // pred_region
        // Predicated region
        $region29: #{encoding_c0.3} parent=27 // pred_check
          %p184 = pneg %p35
        $region30: #{encoding_c0.3} parent=27 // pred_check_branch
          %186 = sbr.rel (%p184) target = $region32
        $region31: #{encoding_c0.3} parent=27 // pred_region
          %s187 = smul.u32 32, %s15
          %p188 = scmp.lt.s32.totalorder %s187, 63
          %s189 = scalar_select %p188, %s187, 63
          %s190 = smul.addr %s189, 3
          %s191 = smul.addr %s190, 4
          %s192 = scalar_lea.vmem %s0, %s191
          %s193 = smul.u32 32, %s15
        $region32: #{encoding_c0.3} parent=27 // pred_fallthru
          _
      $region28: #{encoding_c0.3} parent=5 // pred_fallthru
        _
      %p194 = scmp.le.s32.totalorder 1, %s15
      %p195 = scmp.lt.s32.totalorder %s15, 3
      %p196 = pnand %p194, %p195
      %p197 = pneg %p196
      // Predicated region
      $region33: #{encoding_c0.3} parent=5 // pred_check
        _
      $region34: #{encoding_c0.3} parent=5 // pred_check_branch
        %199 = sbr.rel (%p196) target = $region36
      $region35: #{encoding_c0.3} parent=5 // pred_region
        %s200 = ssub.s32 %s15, 1
        %s201 = smul.u32 32, %s20
        %p202 = scmp.lt.s32.totalorder %s201, 63
        %s203 = scalar_select %p202, %s201, 63
        %s204 = smul.addr %s203, 3
        %s205 = smul.addr %s204, 4
        %s206 = scalar_lea.vmem %s0, %s205
        %p207 = pneg %p41
        %p208 = pneg %p38
        %p209 = pneg %p62
        %p210 = pneg %p59
        %p211 = pneg %p83
        %p212 = pneg %p80
        %p213 = pneg %p104
        %p214 = pneg %p101
        %p215 = pneg %p130
        %p216 = pneg %p127
        %s217 = sand.u32 %s117, 1
        %s218 = scalar_lea.sflag [#allocation3], %s217
        %s219 = sand.u32 %s117, 1
        %s220 = smul.addr %s219, 256
        %s221 = scalar_lea.vmem [#allocation2], %s220
        %p222 = pneg %p156
        %p223 = pneg %p153
        %s224 = smul.u32 8, %s20
        %p225 = scmp.lt.s32.totalorder %s224, 15
        %s226 = scalar_select %p225, %s224, 15
        %s227 = smul.addr %s226, 8
        %s228 = scalar_lea.vmem %s5, %s227
        %s229 = smul.u32 32, %s20
        %p230 = scmp.lt.s32.totalorder %s229, 63
        %s231 = scalar_select %p230, %s229, 63
        %s232 = smul.addr %s231, 3
        %s233 = smul.addr %s232, 4
        %s234 = scalar_lea.vmem %s0, %s233
        %s235 = smul.u32 32, %s20
        %s236 = smul.u32 32, %s20
        %s237 = smul.u32 8, %s20
        %p238 = scmp.lt.s32.totalorder %s237, 15
        %s239 = scalar_select %p238, %s237, 15
        %s240 = smul.addr %s239, 8
        %s241 = scalar_lea.vmem %s5, %s240
        %s242 = smul.u32 8, %s20
        %v244 = vld [vmem:[%s234] sm:$0xff]
        %v245 = vld [vmem:[%s234 + $0x8] sm:$0xf]
        %v246 = vld [vmem:[%s234 + $0xc] sm:$0xff]
        %v247 = vld [vmem:[%s234 + $0x14] sm:$0xf]
        %v248 = vld [vmem:[%s234 + $0x18] sm:$0xff]
        %v249 = vld [vmem:[%s234 + $0x20] sm:$0xf]
        %v250 = vld [vmem:[%s234 + $0x24] sm:$0xff]
        %v251 = vld [vmem:[%s234 + $0x2c] sm:$0xf]
        %v252 = vld [vmem:[%s234 + $0x30] sm:$0xff]
        %v253 = vld [vmem:[%s234 + $0x38] sm:$0xf]
        %v254 = vld [vmem:[%s234 + $0x3c] sm:$0xff]
        %v255 = vld [vmem:[%s234 + $0x44] sm:$0xf]
        %v256 = vld [vmem:[%s234 + $0x48] sm:$0xff]
        %v257 = vld [vmem:[%s234 + $0x50] sm:$0xf]
        %v258 = vld [vmem:[%s234 + $0x54] sm:$0xff]
        %v259 = vld [vmem:[%s234 + $0x5c] sm:$0xf]
        %v260 = vld [vmem:[%s234 + $0x60] sm:$0xff]
        %v261 = vld [vmem:[%s234 + $0x68] sm:$0xf]
        %v262 = vld [vmem:[%s234 + $0x6c] sm:$0xff]
        %v263 = vld [vmem:[%s234 + $0x74] sm:$0xf]
        %v264 = vld [vmem:[%s234 + $0x78] sm:$0xff]
        %v265 = vld [vmem:[%s234 + $0x80] sm:$0xf]
        %v266 = vld [vmem:[%s234 + $0x84] sm:$0xff]
        %v267 = vld [vmem:[%s234 + $0x8c] sm:$0xf]
        %v268 = vld [vmem:[%s234 + $0x90] sm:$0xff]
        %v269 = vld [vmem:[%s234 + $0x98] sm:$0xf]
        %v270 = vld [vmem:[%s234 + $0x9c] sm:$0xff]
        %v271 = vld [vmem:[%s234 + $0xa4] sm:$0xf]
        %v272 = vld [vmem:[%s234 + $0xa8] sm:$0xff]
        %v273 = vld [vmem:[%s234 + $0xb0] sm:$0xf]
        %v274 = vld [vmem:[%s234 + $0xb4] sm:$0xff]
        %v275 = vld [vmem:[%s234 + $0xbc] sm:$0xf]
        %v276 = vld [vmem:[%s234 + $0xc0] sm:$0xff]
        %v277 = vld [vmem:[%s234 + $0xc8] sm:$0xf]
        %v278 = vld [vmem:[%s234 + $0xcc] sm:$0xff]
        %v279 = vld [vmem:[%s234 + $0xd4] sm:$0xf]
        %v280 = vld [vmem:[%s234 + $0xd8] sm:$0xff]
        %v281 = vld [vmem:[%s234 + $0xe0] sm:$0xf]
        %v282 = vld [vmem:[%s234 + $0xe4] sm:$0xff]
        %v283 = vld [vmem:[%s234 + $0xec] sm:$0xf]
        %v284 = vld [vmem:[%s234 + $0xf0] sm:$0xff]
        %v285 = vld [vmem:[%s234 + $0xf8] sm:$0xf]
        %v286 = vld [vmem:[%s234 + $0xfc] sm:$0xff]
        %v287 = vld [vmem:[%s234 + $0x104] sm:$0xf]
        %v288 = vld [vmem:[%s234 + $0x108] sm:$0xff]
        %v289 = vld [vmem:[%s234 + $0x110] sm:$0xf]
        %v290 = vld [vmem:[%s234 + $0x114] sm:$0xff]
        %v291 = vld [vmem:[%s234 + $0x11c] sm:$0xf]
        %v292 = vld [vmem:[%s234 + $0x120] sm:$0xff]
        %v293 = vld [vmem:[%s234 + $0x128] sm:$0xf]
        %v294 = vld [vmem:[%s234 + $0x12c] sm:$0xff]
        %v295 = vld [vmem:[%s234 + $0x134] sm:$0xf]
        %v296 = vld [vmem:[%s234 + $0x138] sm:$0xff]
        %v297 = vld [vmem:[%s234 + $0x140] sm:$0xf]
        %v298 = vld [vmem:[%s234 + $0x144] sm:$0xff]
        %v299 = vld [vmem:[%s234 + $0x14c] sm:$0xf]
        %v300 = vld [vmem:[%s234 + $0x150] sm:$0xff]
        %v301 = vld [vmem:[%s234 + $0x158] sm:$0xf]
        %v302 = vld [vmem:[%s234 + $0x15c] sm:$0xff]
        %v303 = vld [vmem:[%s234 + $0x164] sm:$0xf]
        %v304 = vld [vmem:[%s234 + $0x168] sm:$0xff]
        %v305 = vld [vmem:[%s234 + $0x170] sm:$0xf]
        %v306 = vld [vmem:[%s234 + $0x174] sm:$0xff]
        %v307 = vld [vmem:[%s234 + $0x17c] sm:$0xf]
        %v308 = vld [vmem:[%s1] sm:$0xf]
        %v309 = vld [vmem:[%s1 + $0x4] sm:$0xf]
        %v310 = vld [vmem:[%s1 + $0x8] sm:$0xf]
        %v311 = vld [vmem:[%s1 + $0xc] sm:$0xf]
        %v312 = vld [vmem:[%s1 + $0x10] sm:$0xf]
        %v313 = vld [vmem:[%s1 + $0x14] sm:$0xf]
        %v314 = vld [vmem:[%s1 + $0x18] sm:$0xf]
        %v315 = vld [vmem:[%s1 + $0x1c] sm:$0xf]
        %v316 = vld [vmem:[%s1 + $0x20] sm:$0xf]
        %v317 = vld [vmem:[%s1 + $0x24] sm:$0xf]
        %v318 = vld [vmem:[%s1 + $0x28] sm:$0xf]
        %v319 = vld [vmem:[%s1 + $0x2c] sm:$0xf]
        %v320 = vld [vmem:[%s1 + $0x30] sm:$0xf]
        %v321 = vld [vmem:[%s1 + $0x34] sm:$0xf]
        %v322 = vld [vmem:[%s1 + $0x38] sm:$0xf]
        %v323 = vld [vmem:[%s1 + $0x3c] sm:$0xf]
        %v324 = vld [vmem:[%s1 + $0x40] sm:$0xf]
        %v325 = vld [vmem:[%s1 + $0x44] sm:$0xf]
        %v326 = vld [vmem:[%s1 + $0x48] sm:$0xf]
        %v327 = vld [vmem:[%s1 + $0x4c] sm:$0xf]
        %v328 = vld [vmem:[%s1 + $0x50] sm:$0xf]
        %v329 = vld [vmem:[%s1 + $0x54] sm:$0xf]
        %v330 = vld [vmem:[%s1 + $0x58] sm:$0xf]
        %v331 = vld [vmem:[%s1 + $0x5c] sm:$0xf]
        %v332 = vld [vmem:[%s1 + $0x60] sm:$0xf]
        %v333 = vld [vmem:[%s1 + $0x64] sm:$0xf]
        %v334 = vld [vmem:[%s1 + $0x68] sm:$0xf]
        %v335 = vld [vmem:[%s1 + $0x6c] sm:$0xf]
        %v336 = vld [vmem:[%s1 + $0x70] sm:$0xf]
        %v337 = vld [vmem:[%s1 + $0x74] sm:$0xf]
        %v338 = vld [vmem:[%s1 + $0x78] sm:$0xf]
        %v339 = vld [vmem:[%s1 + $0x7c] sm:$0xf]
        %v340 = vld [vmem:[%s1 + $0x80] sm:$0xf]
        %v341 = vld [vmem:[%s1 + $0x84] sm:$0xf]
        %v342 = vld [vmem:[%s1 + $0x88] sm:$0xf]
        %v343 = vld [vmem:[%s1 + $0x8c] sm:$0xf]
        %v344 = vld [vmem:[%s2] sm:$0x1]
        %v346 = vperm.slane %v344, 0
        %v412 = vunpack.c.l.b16 %v244
        %v413 = vunpack.c.h.b16 %v244
        %v414 = vunpack.c.l.b16 %v245
        %v415 = vunpack.c.l.b16 %v246
        %v416 = vunpack.c.h.b16 %v246
        %v417 = vunpack.c.l.b16 %v247
        %v418 = vunpack.c.l.b16 %v248
        %v419 = vunpack.c.h.b16 %v248
        %v420 = vunpack.c.l.b16 %v249
        %v421 = vunpack.c.l.b16 %v250
        %v422 = vunpack.c.h.b16 %v250
        %v423 = vunpack.c.l.b16 %v251
        %v424 = vunpack.c.l.b16 %v252
        %v425 = vunpack.c.h.b16 %v252
        %v426 = vunpack.c.l.b16 %v253
        %v427 = vunpack.c.l.b16 %v254
        %v428 = vunpack.c.h.b16 %v254
        %v429 = vunpack.c.l.b16 %v255
        %v430 = vunpack.c.l.b16 %v256
        %v431 = vunpack.c.h.b16 %v256
        %v432 = vunpack.c.l.b16 %v257
        %v433 = vunpack.c.l.b16 %v258
        %v434 = vunpack.c.h.b16 %v258
        %v435 = vunpack.c.l.b16 %v259
        %v436 = vunpack.c.l.b16 %v260
        %v437 = vunpack.c.h.b16 %v260
        %v438 = vunpack.c.l.b16 %v261
        %v439 = vunpack.c.l.b16 %v262
        %v440 = vunpack.c.h.b16 %v262
        %v441 = vunpack.c.l.b16 %v263
        %v442 = vunpack.c.l.b16 %v264
        %v443 = vunpack.c.h.b16 %v264
        %v444 = vunpack.c.l.b16 %v265
        %v445 = vunpack.c.l.b16 %v266
        %v446 = vunpack.c.h.b16 %v266
        %v447 = vunpack.c.l.b16 %v267
        %v448 = vunpack.c.l.b16 %v268
        %v449 = vunpack.c.h.b16 %v268
        %v450 = vunpack.c.l.b16 %v269
        %v451 = vunpack.c.l.b16 %v270
        %v452 = vunpack.c.h.b16 %v270
        %v453 = vunpack.c.l.b16 %v271
        %v454 = vunpack.c.l.b16 %v272
        %v455 = vunpack.c.h.b16 %v272
        %v456 = vunpack.c.l.b16 %v273
        %v457 = vunpack.c.l.b16 %v274
        %v458 = vunpack.c.h.b16 %v274
        %v459 = vunpack.c.l.b16 %v275
        %v460 = vunpack.c.l.b16 %v276
        %v461 = vunpack.c.h.b16 %v276
        %v462 = vunpack.c.l.b16 %v277
        %v463 = vunpack.c.l.b16 %v278
        %v464 = vunpack.c.h.b16 %v278
        %v465 = vunpack.c.l.b16 %v279
        %v466 = vunpack.c.l.b16 %v280
        %v467 = vunpack.c.h.b16 %v280
        %v468 = vunpack.c.l.b16 %v281
        %v469 = vunpack.c.l.b16 %v282
        %v470 = vunpack.c.h.b16 %v282
        %v471 = vunpack.c.l.b16 %v283
        %v472 = vunpack.c.l.b16 %v284
        %v473 = vunpack.c.h.b16 %v284
        %v474 = vunpack.c.l.b16 %v285
        %v475 = vunpack.c.l.b16 %v286
        %v476 = vunpack.c.h.b16 %v286
        %v477 = vunpack.c.l.b16 %v287
        %v478 = vunpack.c.l.b16 %v288
        %v479 = vunpack.c.h.b16 %v288
        %v480 = vunpack.c.l.b16 %v289
        %v481 = vunpack.c.l.b16 %v290
        %v482 = vunpack.c.h.b16 %v290
        %v483 = vunpack.c.l.b16 %v291
        %v484 = vunpack.c.l.b16 %v292
        %v485 = vunpack.c.h.b16 %v292
        %v486 = vunpack.c.l.b16 %v293
        %v487 = vunpack.c.l.b16 %v294
        %v488 = vunpack.c.h.b16 %v294
        %v489 = vunpack.c.l.b16 %v295
        %v490 = vunpack.c.l.b16 %v296
        %v491 = vunpack.c.h.b16 %v296
        %v492 = vunpack.c.l.b16 %v297
        %v493 = vunpack.c.l.b16 %v298
        %v494 = vunpack.c.h.b16 %v298
        %v495 = vunpack.c.l.b16 %v299
        %v496 = vunpack.c.l.b16 %v300
        %v497 = vunpack.c.h.b16 %v300
        %v498 = vunpack.c.l.b16 %v301
        %v499 = vunpack.c.l.b16 %v302
        %v500 = vunpack.c.h.b16 %v302
        %v501 = vunpack.c.l.b16 %v303
        %v502 = vunpack.c.l.b16 %v304
        %v503 = vunpack.c.h.b16 %v304
        %v504 = vunpack.c.l.b16 %v305
        %v505 = vunpack.c.l.b16 %v306
        %v506 = vunpack.c.h.b16 %v306
        %v507 = vunpack.c.l.b16 %v307
        %v508 = vpack.c.b16 %v415, %v412
        %v509 = vpack.c.b16 %v416, %v413
        %v510 = vpack.c.b16 %v417, %v414
        %v511 = vpack.c.b16 %v421, %v418
        %v512 = vpack.c.b16 %v422, %v419
        %v513 = vpack.c.b16 %v423, %v420
        %v514 = vpack.c.b16 %v427, %v424
        %v515 = vpack.c.b16 %v428, %v425
        %v516 = vpack.c.b16 %v429, %v426
        %v517 = vpack.c.b16 %v433, %v430
        %v518 = vpack.c.b16 %v434, %v431
        %v519 = vpack.c.b16 %v435, %v432
        %v520 = vpack.c.b16 %v439, %v436
        %v521 = vpack.c.b16 %v440, %v437
        %v522 = vpack.c.b16 %v441, %v438
        %v523 = vpack.c.b16 %v445, %v442
        %v524 = vpack.c.b16 %v446, %v443
        %v525 = vpack.c.b16 %v447, %v444
        %v526 = vpack.c.b16 %v451, %v448
        %v527 = vpack.c.b16 %v452, %v449
        %v528 = vpack.c.b16 %v453, %v450
        %v529 = vpack.c.b16 %v457, %v454
        %v530 = vpack.c.b16 %v458, %v455
        %v531 = vpack.c.b16 %v459, %v456
        %v532 = vpack.c.b16 %v463, %v460
        %v533 = vpack.c.b16 %v464, %v461
        %v534 = vpack.c.b16 %v465, %v462
        %v535 = vpack.c.b16 %v469, %v466
        %v536 = vpack.c.b16 %v470, %v467
        %v537 = vpack.c.b16 %v471, %v468
        %v538 = vpack.c.b16 %v475, %v472
        %v539 = vpack.c.b16 %v476, %v473
        %v540 = vpack.c.b16 %v477, %v474
        %v541 = vpack.c.b16 %v481, %v478
        %v542 = vpack.c.b16 %v482, %v479
        %v543 = vpack.c.b16 %v483, %v480
        %v544 = vpack.c.b16 %v487, %v484
        %v545 = vpack.c.b16 %v488, %v485
        %v546 = vpack.c.b16 %v489, %v486
        %v547 = vpack.c.b16 %v493, %v490
        %v548 = vpack.c.b16 %v494, %v491
        %v549 = vpack.c.b16 %v495, %v492
        %v550 = vpack.c.b16 %v499, %v496
        %v551 = vpack.c.b16 %v500, %v497
        %v552 = vpack.c.b16 %v501, %v498
        %v553 = vpack.c.b16 %v505, %v502
        %v554 = vpack.c.b16 %v506, %v503
        %v555 = vpack.c.b16 %v507, %v504
        %v624 = vunpack.c.l.b16 %v308
        %v625 = vunpack.c.l.b16 %v309
        %v626 = vunpack.c.l.b16 %v310
        %v627 = vunpack.c.l.b16 %v311
        %v628 = vunpack.c.l.b16 %v312
        %v629 = vunpack.c.l.b16 %v313
        %v630 = vunpack.c.l.b16 %v314
        %v631 = vunpack.c.l.b16 %v315
        %v632 = vunpack.c.l.b16 %v316
        %v633 = vunpack.c.l.b16 %v317
        %v634 = vunpack.c.l.b16 %v318
        %v635 = vunpack.c.l.b16 %v319
        %v636 = vunpack.c.l.b16 %v320
        %v637 = vunpack.c.l.b16 %v321
        %v638 = vunpack.c.l.b16 %v322
        %v639 = vunpack.c.l.b16 %v323
        %v640 = vunpack.c.l.b16 %v324
        %v641 = vunpack.c.l.b16 %v325
        %v642 = vunpack.c.l.b16 %v326
        %v643 = vunpack.c.l.b16 %v327
        %v644 = vunpack.c.l.b16 %v328
        %v645 = vunpack.c.l.b16 %v329
        %v646 = vunpack.c.l.b16 %v330
        %v647 = vunpack.c.l.b16 %v331
        %v648 = vunpack.c.l.b16 %v332
        %v649 = vunpack.c.l.b16 %v333
        %v650 = vunpack.c.l.b16 %v334
        %v651 = vunpack.c.l.b16 %v335
        %v652 = vunpack.c.l.b16 %v336
        %v653 = vunpack.c.l.b16 %v337
        %v654 = vunpack.c.l.b16 %v338
        %v655 = vunpack.c.l.b16 %v339
        %v656 = vunpack.c.l.b16 %v340
        %v657 = vunpack.c.l.b16 %v341
        %v658 = vunpack.c.l.b16 %v342
        %v659 = vunpack.c.l.b16 %v343
        %v660 = vpack.c.b16 %v625, %v624
        %v661 = vpack.c.b16 %v627, %v626
        %v662 = vpack.c.b16 %v629, %v628
        %v663 = vpack.c.b16 %v631, %v630
        %v664 = vpack.c.b16 %v633, %v632
        %v665 = vpack.c.b16 %v635, %v634
        %v666 = vpack.c.b16 %v637, %v636
        %v667 = vpack.c.b16 %v639, %v638
        %v668 = vpack.c.b16 %v641, %v640
        %v669 = vpack.c.b16 %v643, %v642
        %v670 = vpack.c.b16 %v645, %v644
        %v671 = vpack.c.b16 %v647, %v646
        %v672 = vpack.c.b16 %v649, %v648
        %v673 = vpack.c.b16 %v651, %v650
        %v674 = vpack.c.b16 %v653, %v652
        %v675 = vpack.c.b16 %v655, %v654
        %v676 = vpack.c.b16 %v657, %v656
        %v677 = vpack.c.b16 %v659, %v658
        %vm696 = vcmask 261120
        %v698 = vsel %vm696, %v510, 0
        %v701 = vsel %vm696, %v513, 0
        %v704 = vsel %vm696, %v516, 0
        %v707 = vsel %vm696, %v519, 0
        %v710 = vsel %vm696, %v522, 0
        %v713 = vsel %vm696, %v525, 0
        %v716 = vsel %vm696, %v528, 0
        %v719 = vsel %vm696, %v531, 0
        %v722 = vsel %vm696, %v534, 0
        %v725 = vsel %vm696, %v537, 0
        %v728 = vsel %vm696, %v540, 0
        %v731 = vsel %vm696, %v543, 0
        %v734 = vsel %vm696, %v546, 0
        %v737 = vsel %vm696, %v549, 0
        %v740 = vsel %vm696, %v552, 0
        %v743 = vsel %vm696, %v555, 0
        %745 = vmatpush.bf16.msra.mxu0 %v667
        %746 = vmatpush.bf16.msra.mxu0 %v666
        %747 = vmatpush.bf16.msra.mxu0 %v665
        %748 = vmatpush.bf16.msra.mxu0 %v664
        %749 = vmatpush.bf16.msra.mxu0 %v663
        %750 = vmatpush.bf16.msra.mxu0 %v662
        %751 = vmatpush.bf16.msra.mxu0 %v661
        %752 = vmatpush.bf16.msra.mxu0 %v660
        %753 = vmatmul.bf16.gmra.mxu0 %v508
        %v754 = vpop.f32.mrf.mxu0
        %v755 = vadd.f32 %v346, %v754
        %v756 = vpop.f32.mrf.mxu0
        %v757 = vadd.f32 %v346, %v756
        %758 = vmatmul.bf16.gmra.mxu0 %v511
        %v759 = vpop.f32.mrf.mxu0
        %v760 = vadd.f32 %v346, %v759
        %v761 = vpop.f32.mrf.mxu0
        %v762 = vadd.f32 %v346, %v761
        %763 = vmatmul.bf16.gmra.mxu0 %v514
        %v764 = vpop.f32.mrf.mxu0
        %v765 = vadd.f32 %v346, %v764
        %v766 = vpop.f32.mrf.mxu0
        %v767 = vadd.f32 %v346, %v766
        %768 = vmatmul.bf16.gmra.mxu0 %v517
        %v769 = vpop.f32.mrf.mxu0
        %v770 = vadd.f32 %v346, %v769
        %v771 = vpop.f32.mrf.mxu0
        %v772 = vadd.f32 %v346, %v771
        %773 = vmatmul.bf16.gmra.mxu0 %v520
        %v774 = vpop.f32.mrf.mxu0
        %v775 = vadd.f32 %v346, %v774
        %v776 = vpop.f32.mrf.mxu0
        %v777 = vadd.f32 %v346, %v776
        %778 = vmatmul.bf16.gmra.mxu0 %v523
        %v779 = vpop.f32.mrf.mxu0
        %v780 = vadd.f32 %v346, %v779
        %v781 = vpop.f32.mrf.mxu0
        %v782 = vadd.f32 %v346, %v781
        %783 = vmatmul.bf16.gmra.mxu0 %v526
        %v784 = vpop.f32.mrf.mxu0
        %v785 = vadd.f32 %v346, %v784
        %v786 = vpop.f32.mrf.mxu0
        %v787 = vadd.f32 %v346, %v786
        %788 = vmatmul.bf16.gmra.mxu0 %v529
        %v789 = vpop.f32.mrf.mxu0
        %v790 = vadd.f32 %v346, %v789
        %v791 = vpop.f32.mrf.mxu0
        %v792 = vadd.f32 %v346, %v791
        %793 = vmatmul.bf16.gmra.mxu0 %v532
        %v794 = vpop.f32.mrf.mxu0
        %v795 = vadd.f32 %v346, %v794
        %v796 = vpop.f32.mrf.mxu0
        %v797 = vadd.f32 %v346, %v796
        %798 = vmatmul.bf16.gmra.mxu0 %v535
        %v799 = vpop.f32.mrf.mxu0
        %v800 = vadd.f32 %v346, %v799
        %v801 = vpop.f32.mrf.mxu0
        %v802 = vadd.f32 %v346, %v801
        %803 = vmatmul.bf16.gmra.mxu0 %v538
        %v804 = vpop.f32.mrf.mxu0
        %v805 = vadd.f32 %v346, %v804
        %v806 = vpop.f32.mrf.mxu0
        %v807 = vadd.f32 %v346, %v806
        %808 = vmatmul.bf16.gmra.mxu0 %v541
        %v809 = vpop.f32.mrf.mxu0
        %v810 = vadd.f32 %v346, %v809
        %v811 = vpop.f32.mrf.mxu0
        %v812 = vadd.f32 %v346, %v811
        %813 = vmatmul.bf16.gmra.mxu0 %v544
        %v814 = vpop.f32.mrf.mxu0
        %v815 = vadd.f32 %v346, %v814
        %v816 = vpop.f32.mrf.mxu0
        %v817 = vadd.f32 %v346, %v816
        %818 = vmatmul.bf16.gmra.mxu0 %v547
        %v819 = vpop.f32.mrf.mxu0
        %v820 = vadd.f32 %v346, %v819
        %v821 = vpop.f32.mrf.mxu0
        %v822 = vadd.f32 %v346, %v821
        %823 = vmatmul.bf16.gmra.mxu0 %v550
        %v824 = vpop.f32.mrf.mxu0
        %v825 = vadd.f32 %v346, %v824
        %v826 = vpop.f32.mrf.mxu0
        %v827 = vadd.f32 %v346, %v826
        %828 = vmatmul.bf16.gmra.mxu0 %v553
        %v829 = vpop.f32.mrf.mxu0
        %v830 = vadd.f32 %v346, %v829
        %v831 = vpop.f32.mrf.mxu0
        %v832 = vadd.f32 %v346, %v831
        %833 = vdwg.mxu0
        %834 = vmatpush.bf16.msra.mxu0 %v675
        %835 = vmatpush.bf16.msra.mxu0 %v674
        %836 = vmatpush.bf16.msra.mxu0 %v673
        %837 = vmatpush.bf16.msra.mxu0 %v672
        %838 = vmatpush.bf16.msra.mxu0 %v671
        %839 = vmatpush.bf16.msra.mxu0 %v670
        %840 = vmatpush.bf16.msra.mxu0 %v669
        %841 = vmatpush.bf16.msra.mxu0 %v668
        %842 = vmatmul.bf16.gmra.mxu0 %v509
        %v843 = vpop.f32.mrf.mxu0
        %v844 = vadd.f32 %v755, %v843
        %v845 = vpop.f32.mrf.mxu0
        %v846 = vadd.f32 %v757, %v845
        %847 = vmatmul.bf16.gmra.mxu0 %v512
        %v848 = vpop.f32.mrf.mxu0
        %v849 = vadd.f32 %v760, %v848
        %v850 = vpop.f32.mrf.mxu0
        %v851 = vadd.f32 %v762, %v850
        %852 = vmatmul.bf16.gmra.mxu0 %v515
        %v853 = vpop.f32.mrf.mxu0
        %v854 = vadd.f32 %v765, %v853
        %v855 = vpop.f32.mrf.mxu0
        %v856 = vadd.f32 %v767, %v855
        %857 = vmatmul.bf16.gmra.mxu0 %v518
        %v858 = vpop.f32.mrf.mxu0
        %v859 = vadd.f32 %v770, %v858
        %v860 = vpop.f32.mrf.mxu0
        %v861 = vadd.f32 %v772, %v860
        %862 = vmatmul.bf16.gmra.mxu0 %v521
        %v863 = vpop.f32.mrf.mxu0
        %v864 = vadd.f32 %v775, %v863
        %v865 = vpop.f32.mrf.mxu0
        %v866 = vadd.f32 %v777, %v865
        %867 = vmatmul.bf16.gmra.mxu0 %v524
        %v868 = vpop.f32.mrf.mxu0
        %v869 = vadd.f32 %v780, %v868
        %v870 = vpop.f32.mrf.mxu0
        %v871 = vadd.f32 %v782, %v870
        %872 = vmatmul.bf16.gmra.mxu0 %v527
        %v873 = vpop.f32.mrf.mxu0
        %v874 = vadd.f32 %v785, %v873
        %v875 = vpop.f32.mrf.mxu0
        %v876 = vadd.f32 %v787, %v875
        %877 = vmatmul.bf16.gmra.mxu0 %v530
        %v878 = vpop.f32.mrf.mxu0
        %v879 = vadd.f32 %v790, %v878
        %v880 = vpop.f32.mrf.mxu0
        %v881 = vadd.f32 %v792, %v880
        %882 = vmatmul.bf16.gmra.mxu0 %v533
        %v883 = vpop.f32.mrf.mxu0
        %v884 = vadd.f32 %v795, %v883
        %v885 = vpop.f32.mrf.mxu0
        %v886 = vadd.f32 %v797, %v885
        %887 = vmatmul.bf16.gmra.mxu0 %v536
        %v888 = vpop.f32.mrf.mxu0
        %v889 = vadd.f32 %v800, %v888
        %v890 = vpop.f32.mrf.mxu0
        %v891 = vadd.f32 %v802, %v890
        %892 = vmatmul.bf16.gmra.mxu0 %v539
        %v893 = vpop.f32.mrf.mxu0
        %v894 = vadd.f32 %v805, %v893
        %v895 = vpop.f32.mrf.mxu0
        %v896 = vadd.f32 %v807, %v895
        %897 = vmatmul.bf16.gmra.mxu0 %v542
        %v898 = vpop.f32.mrf.mxu0
        %v899 = vadd.f32 %v810, %v898
        %v900 = vpop.f32.mrf.mxu0
        %v901 = vadd.f32 %v812, %v900
        %902 = vmatmul.bf16.gmra.mxu0 %v545
        %v903 = vpop.f32.mrf.mxu0
        %v904 = vadd.f32 %v815, %v903
        %v905 = vpop.f32.mrf.mxu0
        %v906 = vadd.f32 %v817, %v905
        %907 = vmatmul.bf16.gmra.mxu0 %v548
        %v908 = vpop.f32.mrf.mxu0
        %v909 = vadd.f32 %v820, %v908
        %v910 = vpop.f32.mrf.mxu0
        %v911 = vadd.f32 %v822, %v910
        %912 = vmatmul.bf16.gmra.mxu0 %v551
        %v913 = vpop.f32.mrf.mxu0
        %v914 = vadd.f32 %v825, %v913
        %v915 = vpop.f32.mrf.mxu0
        %v916 = vadd.f32 %v827, %v915
        %917 = vmatmul.bf16.gmra.mxu0 %v554
        %v918 = vpop.f32.mrf.mxu0
        %v919 = vadd.f32 %v830, %v918
        %v920 = vpop.f32.mrf.mxu0
        %v921 = vadd.f32 %v832, %v920
        %922 = vdwg.mxu0
        %923 = vmatpush.bf16.msra.mxu0 0
        %924 = vmatpush.bf16.msra.mxu0 0
        %925 = vmatpush.bf16.msra.mxu0 0
        %926 = vmatpush.bf16.msra.mxu0 0
        %927 = vmatpush.bf16.msra.mxu0 0
        %928 = vmatpush.bf16.msra.mxu0 0
        %929 = vmatpush.bf16.msra.mxu0 %v677
        %930 = vmatpush.bf16.msra.mxu0 %v676
        %931 = vmatmul.bf16.gmra.mxu0 %v698
        %v932 = vpop.f32.mrf.mxu0
        %v933 = vadd.f32 %v844, %v932
        %v934 = vpop.f32.mrf.mxu0
        %v935 = vadd.f32 %v846, %v934
        %936 = vmatmul.bf16.gmra.mxu0 %v701
        %v937 = vpop.f32.mrf.mxu0
        %v938 = vadd.f32 %v849, %v937
        %v939 = vpop.f32.mrf.mxu0
        %v940 = vadd.f32 %v851, %v939
        %941 = vmatmul.bf16.gmra.mxu0 %v704
        %v942 = vpop.f32.mrf.mxu0
        %v943 = vadd.f32 %v854, %v942
        %v944 = vpop.f32.mrf.mxu0
        %v945 = vadd.f32 %v856, %v944
        %946 = vmatmul.bf16.gmra.mxu0 %v707
        %v947 = vpop.f32.mrf.mxu0
        %v948 = vadd.f32 %v859, %v947
        %v949 = vpop.f32.mrf.mxu0
        %v950 = vadd.f32 %v861, %v949
        %951 = vmatmul.bf16.gmra.mxu0 %v710
        %v952 = vpop.f32.mrf.mxu0
        %v953 = vadd.f32 %v864, %v952
        %v954 = vpop.f32.mrf.mxu0
        %v955 = vadd.f32 %v866, %v954
        %956 = vmatmul.bf16.gmra.mxu0 %v713
        %v957 = vpop.f32.mrf.mxu0
        %v958 = vadd.f32 %v869, %v957
        %v959 = vpop.f32.mrf.mxu0
        %v960 = vadd.f32 %v871, %v959
        %961 = vmatmul.bf16.gmra.mxu0 %v716
        %v962 = vpop.f32.mrf.mxu0
        %v963 = vadd.f32 %v874, %v962
        %v964 = vpop.f32.mrf.mxu0
        %v965 = vadd.f32 %v876, %v964
        %966 = vmatmul.bf16.gmra.mxu0 %v719
        %v967 = vpop.f32.mrf.mxu0
        %v968 = vadd.f32 %v879, %v967
        %v969 = vpop.f32.mrf.mxu0
        %v970 = vadd.f32 %v881, %v969
        %971 = vmatmul.bf16.gmra.mxu0 %v722
        %v972 = vpop.f32.mrf.mxu0
        %v973 = vadd.f32 %v884, %v972
        %v974 = vpop.f32.mrf.mxu0
        %v975 = vadd.f32 %v886, %v974
        %976 = vmatmul.bf16.gmra.mxu0 %v725
        %v977 = vpop.f32.mrf.mxu0
        %v978 = vadd.f32 %v889, %v977
        %v979 = vpop.f32.mrf.mxu0
        %v980 = vadd.f32 %v891, %v979
        %981 = vmatmul.bf16.gmra.mxu0 %v728
        %v982 = vpop.f32.mrf.mxu0
        %v983 = vadd.f32 %v894, %v982
        %v984 = vpop.f32.mrf.mxu0
        %v985 = vadd.f32 %v896, %v984
        %986 = vmatmul.bf16.gmra.mxu0 %v731
        %v987 = vpop.f32.mrf.mxu0
        %v988 = vadd.f32 %v899, %v987
        %v989 = vpop.f32.mrf.mxu0
        %v990 = vadd.f32 %v901, %v989
        %991 = vmatmul.bf16.gmra.mxu0 %v734
        %v992 = vpop.f32.mrf.mxu0
        %v993 = vadd.f32 %v904, %v992
        %v994 = vpop.f32.mrf.mxu0
        %v995 = vadd.f32 %v906, %v994
        %996 = vmatmul.bf16.gmra.mxu0 %v737
        %v997 = vpop.f32.mrf.mxu0
        %v998 = vadd.f32 %v909, %v997
        %v999 = vpop.f32.mrf.mxu0
        %v1000 = vadd.f32 %v911, %v999
        %1001 = vmatmul.bf16.gmra.mxu0 %v740
        %v1002 = vpop.f32.mrf.mxu0
        %v1003 = vadd.f32 %v914, %v1002
        %v1004 = vpop.f32.mrf.mxu0
        %v1005 = vadd.f32 %v916, %v1004
        %1006 = vmatmul.bf16.gmra.mxu0 %v743
        %v1007 = vpop.f32.mrf.mxu0
        %v1008 = vadd.f32 %v919, %v1007
        %v1009 = vpop.f32.mrf.mxu0
        %v1010 = vadd.f32 %v921, %v1009
        %1011 = vdwg.mxu0
        %v1012 = vmax.f32 %v933, 0.0
        %v1013 = vmax.f32 %v935, 0.0
        %v1014 = vmax.f32 %v938, 0.0
        %v1015 = vmax.f32 %v940, 0.0
        %v1016 = vmax.f32 %v943, 0.0
        %v1017 = vmax.f32 %v945, 0.0
        %v1018 = vmax.f32 %v948, 0.0
        %v1019 = vmax.f32 %v950, 0.0
        %v1020 = vmax.f32 %v953, 0.0
        %v1021 = vmax.f32 %v955, 0.0
        %v1022 = vmax.f32 %v958, 0.0
        %v1023 = vmax.f32 %v960, 0.0
        %v1024 = vmax.f32 %v963, 0.0
        %v1025 = vmax.f32 %v965, 0.0
        %v1026 = vmax.f32 %v968, 0.0
        %v1027 = vmax.f32 %v970, 0.0
        %v1028 = vmax.f32 %v973, 0.0
        %v1029 = vmax.f32 %v975, 0.0
        %v1030 = vmax.f32 %v978, 0.0
        %v1031 = vmax.f32 %v980, 0.0
        %v1032 = vmax.f32 %v983, 0.0
        %v1033 = vmax.f32 %v985, 0.0
        %v1034 = vmax.f32 %v988, 0.0
        %v1035 = vmax.f32 %v990, 0.0
        %v1036 = vmax.f32 %v993, 0.0
        %v1037 = vmax.f32 %v995, 0.0
        %v1038 = vmax.f32 %v998, 0.0
        %v1039 = vmax.f32 %v1000, 0.0
        %v1040 = vmax.f32 %v1003, 0.0
        %v1041 = vmax.f32 %v1005, 0.0
        %v1042 = vmax.f32 %v1008, 0.0
        %v1043 = vmax.f32 %v1010, 0.0
        %vm1044 = vcmask 523264
        %1045 = vst.msk [vmem:[%s221] sm:$0xff] %vm1044, %v1012
        %1046 = vst.msk [vmem:[%s221 + $0x8] sm:$0xff] %vm1044, %v1013
        %1047 = vst.msk [vmem:[%s221 + $0x10] sm:$0xff] %vm1044, %v1014
        %1048 = vst.msk [vmem:[%s221 + $0x18] sm:$0xff] %vm1044, %v1015
        %1049 = vst.msk [vmem:[%s221 + $0x20] sm:$0xff] %vm1044, %v1016
        %1050 = vst.msk [vmem:[%s221 + $0x28] sm:$0xff] %vm1044, %v1017
        %1051 = vst.msk [vmem:[%s221 + $0x30] sm:$0xff] %vm1044, %v1018
        %1052 = vst.msk [vmem:[%s221 + $0x38] sm:$0xff] %vm1044, %v1019
        %1053 = vst.msk [vmem:[%s221 + $0x40] sm:$0xff] %vm1044, %v1020
        %1054 = vst.msk [vmem:[%s221 + $0x48] sm:$0xff] %vm1044, %v1021
        %1055 = vst.msk [vmem:[%s221 + $0x50] sm:$0xff] %vm1044, %v1022
        %1056 = vst.msk [vmem:[%s221 + $0x58] sm:$0xff] %vm1044, %v1023
        %1057 = vst.msk [vmem:[%s221 + $0x60] sm:$0xff] %vm1044, %v1024
        %1058 = vst.msk [vmem:[%s221 + $0x68] sm:$0xff] %vm1044, %v1025
        %1059 = vst.msk [vmem:[%s221 + $0x70] sm:$0xff] %vm1044, %v1026
        %1060 = vst.msk [vmem:[%s221 + $0x78] sm:$0xff] %vm1044, %v1027
        %1061 = vst.msk [vmem:[%s221 + $0x80] sm:$0xff] %vm1044, %v1028
        %1062 = vst.msk [vmem:[%s221 + $0x88] sm:$0xff] %vm1044, %v1029
        %1063 = vst.msk [vmem:[%s221 + $0x90] sm:$0xff] %vm1044, %v1030
        %1064 = vst.msk [vmem:[%s221 + $0x98] sm:$0xff] %vm1044, %v1031
        %1065 = vst.msk [vmem:[%s221 + $0xa0] sm:$0xff] %vm1044, %v1032
        %1066 = vst.msk [vmem:[%s221 + $0xa8] sm:$0xff] %vm1044, %v1033
        %1067 = vst.msk [vmem:[%s221 + $0xb0] sm:$0xff] %vm1044, %v1034
        %1068 = vst.msk [vmem:[%s221 + $0xb8] sm:$0xff] %vm1044, %v1035
        %1069 = vst.msk [vmem:[%s221 + $0xc0] sm:$0xff] %vm1044, %v1036
        %1070 = vst.msk [vmem:[%s221 + $0xc8] sm:$0xff] %vm1044, %v1037
        %1071 = vst.msk [vmem:[%s221 + $0xd0] sm:$0xff] %vm1044, %v1038
        %1072 = vst.msk [vmem:[%s221 + $0xd8] sm:$0xff] %vm1044, %v1039
        %1073 = vst.msk [vmem:[%s221 + $0xe0] sm:$0xff] %vm1044, %v1040
        %1074 = vst.msk [vmem:[%s221 + $0xe8] sm:$0xff] %vm1044, %v1041
        %1075 = vst.msk [vmem:[%s221 + $0xf0] sm:$0xff] %vm1044, %v1042
        %1076 = vst.msk [vmem:[%s221 + $0xf8] sm:$0xff] %vm1044, %v1043
        %v1077 = vld [vmem:[%s3] sm:$0xff]
        %v1078 = vld [vmem:[%s3 + $0x8] sm:$0xff]
        %v1079 = vld [vmem:[%s3 + $0x10] sm:$0xff]
        %v1080 = vld [vmem:[%s3 + $0x18] sm:$0xff]
        %v1081 = vld [vmem:[%s3 + $0x20] sm:$0xff]
        %v1082 = vld [vmem:[%s3 + $0x28] sm:$0xff]
        %v1083 = vld [vmem:[%s3 + $0x30] sm:$0xff]
        %v1084 = vld [vmem:[%s3 + $0x38] sm:$0xff]
        %v1085 = vpack.c.bf16 %v1013, %v1012
        %v1086 = vpack.c.bf16 %v1015, %v1014
        %v1087 = vpack.c.bf16 %v1017, %v1016
        %v1088 = vpack.c.bf16 %v1019, %v1018
        %v1089 = vpack.c.bf16 %v1021, %v1020
        %v1090 = vpack.c.bf16 %v1023, %v1022
        %v1091 = vpack.c.bf16 %v1025, %v1024
        %v1092 = vpack.c.bf16 %v1027, %v1026
        %v1093 = vpack.c.bf16 %v1029, %v1028
        %v1094 = vpack.c.bf16 %v1031, %v1030
        %v1095 = vpack.c.bf16 %v1033, %v1032
        %v1096 = vpack.c.bf16 %v1035, %v1034
        %v1097 = vpack.c.bf16 %v1037, %v1036
        %v1098 = vpack.c.bf16 %v1039, %v1038
        %v1099 = vpack.c.bf16 %v1041, %v1040
        %v1100 = vpack.c.bf16 %v1043, %v1042
        %v1109 = vunpack.c.l.b16 %v1077
        %v1110 = vunpack.c.h.b16 %v1077
        %v1111 = vunpack.c.l.b16 %v1078
        %v1112 = vunpack.c.h.b16 %v1078
        %v1113 = vunpack.c.l.b16 %v1079
        %v1114 = vunpack.c.h.b16 %v1079
        %v1115 = vunpack.c.l.b16 %v1080
        %v1116 = vunpack.c.h.b16 %v1080
        %v1117 = vunpack.c.l.b16 %v1081
        %v1118 = vunpack.c.h.b16 %v1081
        %v1119 = vunpack.c.l.b16 %v1082
        %v1120 = vunpack.c.h.b16 %v1082
        %v1121 = vunpack.c.l.b16 %v1083
        %v1122 = vunpack.c.h.b16 %v1083
        %v1123 = vunpack.c.l.b16 %v1084
        %v1124 = vunpack.c.h.b16 %v1084
        %v1125 = vpack.c.b16 %v1111, %v1109
        %v1126 = vpack.c.b16 %v1112, %v1110
        %v1127 = vpack.c.b16 %v1115, %v1113
        %v1128 = vpack.c.b16 %v1116, %v1114
        %v1129 = vpack.c.b16 %v1119, %v1117
        %v1130 = vpack.c.b16 %v1120, %v1118
        %v1131 = vpack.c.b16 %v1123, %v1121
        %v1132 = vpack.c.b16 %v1124, %v1122
        %1141 = vmatpush.bf16.msra.mxu0 %v1092
        %1142 = vmatpush.bf16.msra.mxu0 %v1091
        %1143 = vmatpush.bf16.msra.mxu0 %v1090
        %1144 = vmatpush.bf16.msra.mxu0 %v1089
        %1145 = vmatpush.bf16.msra.mxu0 %v1088
        %1146 = vmatpush.bf16.msra.mxu0 %v1087
        %1147 = vmatpush.bf16.msra.mxu0 %v1086
        %1148 = vmatpush.bf16.msra.mxu0 %v1085
        %1149 = vmatmul.bf16.gmra.mxu0 %v1125
        %v1150 = vpop.f32.mrf.mxu0
        %v1151 = vadd.f32 0.0, %v1150
        %v1152 = vpop.f32.mrf.mxu0
        %v1153 = vadd.f32 0.0, %v1152
        %1154 = vmatmul.bf16.gmra.mxu0 %v1127
        %v1155 = vpop.f32.mrf.mxu0
        %v1156 = vadd.f32 0.0, %v1155
        %v1157 = vpop.f32.mrf.mxu0
        %v1158 = vadd.f32 0.0, %v1157
        %1159 = vmatmul.bf16.gmra.mxu0 %v1129
        %v1160 = vpop.f32.mrf.mxu0
        %v1161 = vadd.f32 0.0, %v1160
        %v1162 = vpop.f32.mrf.mxu0
        %v1163 = vadd.f32 0.0, %v1162
        %1164 = vmatmul.bf16.gmra.mxu0 %v1131
        %v1165 = vpop.f32.mrf.mxu0
        %v1166 = vadd.f32 0.0, %v1165
        %v1167 = vpop.f32.mrf.mxu0
        %v1168 = vadd.f32 0.0, %v1167
        %1169 = vdwg.mxu0
        %1170 = vmatpush.bf16.msra.mxu0 %v1100
        %1171 = vmatpush.bf16.msra.mxu0 %v1099
        %1172 = vmatpush.bf16.msra.mxu0 %v1098
        %1173 = vmatpush.bf16.msra.mxu0 %v1097
        %1174 = vmatpush.bf16.msra.mxu0 %v1096
        %1175 = vmatpush.bf16.msra.mxu0 %v1095
        %1176 = vmatpush.bf16.msra.mxu0 %v1094
        %1177 = vmatpush.bf16.msra.mxu0 %v1093
        %1178 = vmatmul.bf16.gmra.mxu0 %v1126
        %v1179 = vpop.f32.mrf.mxu0
        %v1180 = vadd.f32 %v1151, %v1179
        %v1181 = vpop.f32.mrf.mxu0
        %v1182 = vadd.f32 %v1153, %v1181
        %1183 = vmatmul.bf16.gmra.mxu0 %v1128
        %v1184 = vpop.f32.mrf.mxu0
        %v1185 = vadd.f32 %v1156, %v1184
        %v1186 = vpop.f32.mrf.mxu0
        %v1187 = vadd.f32 %v1158, %v1186
        %1188 = vmatmul.bf16.gmra.mxu0 %v1130
        %v1189 = vpop.f32.mrf.mxu0
        %v1190 = vadd.f32 %v1161, %v1189
        %v1191 = vpop.f32.mrf.mxu0
        %v1192 = vadd.f32 %v1163, %v1191
        %1193 = vmatmul.bf16.gmra.mxu0 %v1132
        %v1194 = vpop.f32.mrf.mxu0
        %v1195 = vadd.f32 %v1166, %v1194
        %v1196 = vpop.f32.mrf.mxu0
        %v1197 = vadd.f32 %v1168, %v1196
        %1198 = vdwg.mxu0
        %1199 = vst.msk [vmem:[%s241] sm:$0xff] %vm1044, %v1180
        %1200 = vst.msk [vmem:[%s241 + $0x8] sm:$0xff] %vm1044, %v1182
        %1201 = vst.msk [vmem:[%s241 + $0x10] sm:$0xff] %vm1044, %v1185
        %1202 = vst.msk [vmem:[%s241 + $0x18] sm:$0xff] %vm1044, %v1187
        %1203 = vst.msk [vmem:[%s241 + $0x20] sm:$0xff] %vm1044, %v1190
        %1204 = vst.msk [vmem:[%s241 + $0x28] sm:$0xff] %vm1044, %v1192
        %1205 = vst.msk [vmem:[%s241 + $0x30] sm:$0xff] %vm1044, %v1195
        %1206 = vst.msk [vmem:[%s241 + $0x38] sm:$0xff] %vm1044, %v1197
        %s1207 = sand.u32 %s117, 1
        %s1208 = scalar_lea.sflag [#allocation3], %s1207
        %s1209 = sand.u32 %s117, 1
        %s1210 = smul.addr %s1209, 256
        %s1211 = scalar_lea.vmem [#allocation2], %s1210
        %s1212 = smul.u32 8, %s20
        %p1213 = scmp.lt.s32.totalorder %s1212, 15
        %s1214 = scalar_select %p1213, %s1212, 15
        %s1215 = smul.addr %s1214, 8
        %s1216 = scalar_lea.vmem %s5, %s1215
        // Predicated region
        $region37: #{encoding_c0.3} parent=35 // pred_check
          %p1217 = pneg %p127
        $region38: #{encoding_c0.3} parent=35 // pred_check_branch
          %1219 = sbr.rel (%p1217) target = $region40
        $region39: #{encoding_c0.3} parent=35 // pred_region
          %s1220 = smul.u32 32, %s20
          %1222 = vsyncadd %s1208, 0
          %s1223 = smul.addr %s1220, 8
          %s1224 = scalar_lea.hbm %s4, %s1223
          %s1225 = sshll.u32 %s1211, 4
          %s1226 = int_to_ptr.vmem [resolvable:$true] %s1225
          %s1227 = sshll.u32 %s1224, 4
          %s1228 = int_to_ptr.hbm [resolvable:$true] %s1227
          %1233 = dma.vmem_to_hbm [thread:$0]  %s1226, 4096, %s1228, %s1208, 128, 128, 8
        $region40: #{encoding_c0.3} parent=35 // pred_fallthru
          _
        // Predicated region
        $region41: #{encoding_c0.3} parent=35 // pred_check
          %p1234 = pneg %p153
        $region42: #{encoding_c0.3} parent=35 // pred_check_branch
          %1236 = sbr.rel (%p1234) target = $region44
        $region43: #{encoding_c0.3} parent=35 // pred_region
          %s1237 = smul.u32 8, %s20
        $region44: #{encoding_c0.3} parent=35 // pred_fallthru
          _
      $region36: #{encoding_c0.3} parent=5 // pred_fallthru
        _
      %p1238 = scmp.le.s32.totalorder 2, %s15
      // Predicated region
      $region45: #{encoding_c0.3} parent=5 // pred_check
        %p1239 = pneg %p1238
      $region46: #{encoding_c0.3} parent=5 // pred_check_branch
        %1241 = sbr.rel (%p1239) target = $region48
      $region47: #{encoding_c0.3} parent=5 // pred_region
        %s1242 = ssub.s32 %s15, 2
        // Predicated region
        $region49: #{encoding_c0.3} parent=47 // pred_check
          %p1243 = pneg %p133
        $region50: #{encoding_c0.3} parent=47 // pred_check_branch
          %1245 = sbr.rel (%p1243) target = $region52
        $region51: #{encoding_c0.3} parent=47 // pred_region
          %s1246 = sand.u32 %s118, 1
          %s1247 = scalar_lea.sflag [#allocation3], %s1246
          %s1248 = sand.u32 %s118, 1
          %s1249 = smul.addr %s1248, 256
          %s1250 = scalar_lea.vmem [#allocation2], %s1249
          %1252 = dma.done %s1247, 4096
        $region52: #{encoding_c0.3} parent=47 // pred_fallthru
          _
        // Predicated region
        $region53: #{encoding_c0.3} parent=47 // pred_check
          %p1253 = pneg %p159
        $region54: #{encoding_c0.3} parent=47 // pred_check_branch
          %1255 = sbr.rel (%p1253) target = $region56
        $region55: #{encoding_c0.3} parent=47 // pred_region
          %s1256 = smul.u32 8, %s21
          %p1257 = scmp.lt.s32.totalorder %s1256, 15
          %s1258 = scalar_select %p1257, %s1256, 15
          %s1259 = smul.addr %s1258, 8
          %s1260 = scalar_lea.vmem %s5, %s1259
        $region56: #{encoding_c0.3} parent=47 // pred_fallthru
          _
      $region48: #{encoding_c0.3} parent=5 // pred_fallthru
        _
    $region6: #{encoding_c0.3} parent=1 // loop_footer
      %s19 = sadd.s32 1, %s15
    $region7: #{encoding_c0.3} parent=1 // loop_footer_branch
      %14 = sbr.rel target = $region3
    $region8: #{encoding_c0.3} parent=1 // loop_exit
      _
    %1261 = vsyncpa [#allocation3], 1
    %s1262 = scalar_lea.sflag [#allocation3], 1
    %1263 = vsyncpa %s1262, 1

// kernel: encoding_c0.4
$region0: #{encoding_c0.4}
  #allocation0 [shape = 'u32[]', space=smem, size = 0x4, offset = 0x4, fixed_abs, tag = 'smem constant byte address 0x4 - core index']
  #allocation1 [shape = 'u32[72,128]{1,0:T(1,128)}', space=vmem, size = 0x9000, scoped, tag = 'internal scratch']
  %s0 = inlined_call_operand.vmem [shape: bf16[128,576], index: 0, kind: input, shape index: {}]
  %s1 = inlined_call_operand.vmem [shape: bf16[576,128], index: 1, kind: input, shape index: {}]
  %s2 = inlined_call_operand.vmem [shape: f32[1,128], index: 2, kind: input, shape index: {}]
  %s3 = inlined_call_operand.vmem [shape: bf16[16,64], index: 3, kind: input, shape index: {}]
  %s4 = inlined_call_operand.hbm [shape: f32[128,128], index: 4, kind: output, shape index: {0}]
  %s5 = inlined_call_operand.vmem [shape: f32[32,128], index: 5, kind: output, shape index: {1}]
  %6 = xla_tuple %s4, %s5
  %s7 = sld [smem:[#allocation0]]
  $region57: #{encoding_c0.4} parent=0
    _
  %s9 = ssub.s32 1, %s7
  %s10 = scalar_select 0, %s9, %s7
  $region1: #{encoding_c0.4} parent=0
    #allocation2 [shape = 'u8[65536]{0}', space=vmem, size = 0x10000, scoped, tag = 'output window, operand 0']
    #allocation3 [shape = 's32[2]{0}', space=sflag, size = 0x8, scoped, tag = 'scoped memory for encoding_c0.4']
    %11 = vsyncpa [#allocation3], 0
    %s12 = scalar_lea.sflag [#allocation3], 1
    %13 = vsyncpa %s12, 0
    loop: start=0, step=1, limit=4
    $region2: #{encoding_c0.4} parent=1 // loop_pre_header
      _
    $region3: #{encoding_c0.4} parent=1 // loop_header
      %s15 = sphi 0, %s19
      %p16 = scmp.ge.s32.totalorder %s15, 4
      %s25 = sphi 0, %s27
      %s28 = sphi 0, %s25
      %s29 = sphi 0, %s28
      %s45 = sphi 0, %s29
      %s49 = sphi 0, %s49
      %s51 = sphi 0, %s49
      %s52 = sphi 0, %s51
      %s66 = sphi 0, %s52
      %s70 = sphi 0, %s70
      %s72 = sphi 0, %s70
      %s73 = sphi 0, %s72
      %s87 = sphi 0, %s73
      %s91 = sphi 0, %s91
      %s93 = sphi 0, %s91
      %s94 = sphi 0, %s93
      %s108 = sphi 0, %s94
      %s114 = sphi 0, %s116
      %s117 = sphi 0, %s114
      %s118 = sphi 0, %s117
      %s134 = sphi 0, %s118
      %s140 = sphi 0, %s142
      %s143 = sphi 0, %s140
      %s144 = sphi 0, %s143
      %s160 = sphi 0, %s144
    $region4: #{encoding_c0.4} parent=1 // loop_header_branch
      %18 = sbr.rel (%p16) target = $region8
    $region5: #{encoding_c0.4} parent=1 // loop_body
      %s20 = ssub.s32 %s15, 1
      %s21 = ssub.s32 %s15, 2
      %s22 = sadd.s32 %s15, 1
      %s23 = ssub.s32 %s15, %s22
      %p24 = scmp.eq.s32.totalorder %s23, 0
      %s26 = sadd.s32 %s25, 1
      %s27 = scalar_select %p24, %s25, %s26
      %p30 = pneg %p24
      %p31 = scmp.eq.s32.totalorder %s15, 1
      %p32 = por %p30, %p31
      %p33 = scmp.ne.s32.totalorder %s25, %s28
      %p34 = scmp.eq.s32.totalorder %s15, 0
      %p35 = por %p33, %p34
      %p36 = scmp.ne.s32.totalorder %s25, %s28
      %p37 = scmp.eq.s32.totalorder %s20, 1
      %p38 = por %p36, %p37
      %p39 = scmp.ne.s32.totalorder %s28, %s29
      %p40 = scmp.eq.s32.totalorder %s20, 0
      %p41 = por %p39, %p40
      %p42 = scmp.ne.s32.totalorder %s28, %s29
      %p43 = scmp.eq.s32.totalorder %s21, 1
      %p44 = por %p42, %p43
      %p46 = scmp.ne.s32.totalorder %s29, %s45
      %p47 = scmp.eq.s32.totalorder %s21, 0
      %p48 = por %p46, %p47
      %s50 = sadd.s32 %s49, 1
      %p53 = scmp.eq.s32.totalorder %s15, 1
      %p54 = scmp.ne.s32.totalorder %s49, %s51
      %p55 = scmp.eq.s32.totalorder %s15, 0
      %p56 = por %p54, %p55
      %p57 = scmp.ne.s32.totalorder %s49, %s51
      %p58 = scmp.eq.s32.totalorder %s20, 1
      %p59 = por %p57, %p58
      %p60 = scmp.ne.s32.totalorder %s51, %s52
      %p61 = scmp.eq.s32.totalorder %s20, 0
      %p62 = por %p60, %p61
      %p63 = scmp.ne.s32.totalorder %s51, %s52
      %p64 = scmp.eq.s32.totalorder %s21, 1
      %p65 = por %p63, %p64
      %p67 = scmp.ne.s32.totalorder %s52, %s66
      %p68 = scmp.eq.s32.totalorder %s21, 0
      %p69 = por %p67, %p68
      %s71 = sadd.s32 %s70, 1
      %p74 = scmp.eq.s32.totalorder %s15, 1
      %p75 = scmp.ne.s32.totalorder %s70, %s72
      %p76 = scmp.eq.s32.totalorder %s15, 0
      %p77 = por %p75, %p76
      %p78 = scmp.ne.s32.totalorder %s70, %s72
      %p79 = scmp.eq.s32.totalorder %s20, 1
      %p80 = por %p78, %p79
      %p81 = scmp.ne.s32.totalorder %s72, %s73
      %p82 = scmp.eq.s32.totalorder %s20, 0
      %p83 = por %p81, %p82
      %p84 = scmp.ne.s32.totalorder %s72, %s73
      %p85 = scmp.eq.s32.totalorder %s21, 1
      %p86 = por %p84, %p85
      %p88 = scmp.ne.s32.totalorder %s73, %s87
      %p89 = scmp.eq.s32.totalorder %s21, 0
      %p90 = por %p88, %p89
      %s92 = sadd.s32 %s91, 1
      %p95 = scmp.eq.s32.totalorder %s15, 1
      %p96 = scmp.ne.s32.totalorder %s91, %s93
      %p97 = scmp.eq.s32.totalorder %s15, 0
      %p98 = por %p96, %p97
      %p99 = scmp.ne.s32.totalorder %s91, %s93
      %p100 = scmp.eq.s32.totalorder %s20, 1
      %p101 = por %p99, %p100
      %p102 = scmp.ne.s32.totalorder %s93, %s94
      %p103 = scmp.eq.s32.totalorder %s20, 0
      %p104 = por %p102, %p103
      %p105 = scmp.ne.s32.totalorder %s93, %s94
      %p106 = scmp.eq.s32.totalorder %s21, 1
      %p107 = por %p105, %p106
      %p109 = scmp.ne.s32.totalorder %s94, %s108
      %p110 = scmp.eq.s32.totalorder %s21, 0
      %p111 = por %p109, %p110
      %s112 = ssub.s32 %s15, %s22
      %p113 = scmp.eq.s32.totalorder %s112, 0
      %s115 = sadd.s32 %s114, 1
      %s116 = scalar_select %p113, %s114, %s115
      %p119 = pneg %p113
      %p120 = scmp.eq.s32.totalorder %s15, 1
      %p121 = por %p119, %p120
      %p122 = scmp.ne.s32.totalorder %s114, %s117
      %p123 = scmp.eq.s32.totalorder %s15, 0
      %p124 = por %p122, %p123
      %p125 = scmp.ne.s32.totalorder %s114, %s117
      %p126 = scmp.eq.s32.totalorder %s20, 1
      %p127 = por %p125, %p126
      %p128 = scmp.ne.s32.totalorder %s117, %s118
      %p129 = scmp.eq.s32.totalorder %s20, 0
      %p130 = por %p128, %p129
      %p131 = scmp.ne.s32.totalorder %s117, %s118
      %p132 = scmp.eq.s32.totalorder %s21, 1
      %p133 = por %p131, %p132
      %p135 = scmp.ne.s32.totalorder %s118, %s134
      %p136 = scmp.eq.s32.totalorder %s21, 0
      %p137 = por %p135, %p136
      %s138 = ssub.s32 %s15, %s22
      %p139 = scmp.eq.s32.totalorder %s138, 0
      %s141 = sadd.s32 %s140, 1
      %s142 = scalar_select %p139, %s140, %s141
      %p145 = pneg %p139
      %p146 = scmp.eq.s32.totalorder %s15, 1
      %p147 = por %p145, %p146
      %p148 = scmp.ne.s32.totalorder %s140, %s143
      %p149 = scmp.eq.s32.totalorder %s15, 0
      %p150 = por %p148, %p149
      %p151 = scmp.ne.s32.totalorder %s140, %s143
      %p152 = scmp.eq.s32.totalorder %s20, 1
      %p153 = por %p151, %p152
      %p154 = scmp.ne.s32.totalorder %s143, %s144
      %p155 = scmp.eq.s32.totalorder %s20, 0
      %p156 = por %p154, %p155
      %p157 = scmp.ne.s32.totalorder %s143, %s144
      %p158 = scmp.eq.s32.totalorder %s21, 1
      %p159 = por %p157, %p158
      %p161 = scmp.ne.s32.totalorder %s144, %s160
      %p162 = scmp.eq.s32.totalorder %s21, 0
      %p163 = por %p161, %p162
      %p164 = scmp.le.s32.totalorder 1, %s15
      %p165 = scmp.lt.s32.totalorder %s15, 3
      %p166 = pnand %p164, %p165
      %p167 = pneg %p166
      // Predicated region
      $region9: #{encoding_c0.4} parent=5 // pred_check
        _
      $region10: #{encoding_c0.4} parent=5 // pred_check_branch
        %169 = sbr.rel (%p166) target = $region12
      $region11: #{encoding_c0.4} parent=5 // pred_region
        %s170 = ssub.s32 %s15, 1
        // Predicated region
        $region13: #{encoding_c0.4} parent=11 // pred_check
          %p171 = pneg %p62
        $region14: #{encoding_c0.4} parent=11 // pred_check_branch
          %173 = sbr.rel (%p171) target = $region16
        $region15: #{encoding_c0.4} parent=11 // pred_region
          _
        $region16: #{encoding_c0.4} parent=11 // pred_fallthru
          _
        // Predicated region
        $region17: #{encoding_c0.4} parent=11 // pred_check
          %p174 = pneg %p83
        $region18: #{encoding_c0.4} parent=11 // pred_check_branch
          %176 = sbr.rel (%p174) target = $region20
        $region19: #{encoding_c0.4} parent=11 // pred_region
          _
        $region20: #{encoding_c0.4} parent=11 // pred_fallthru
          _
        // Predicated region
        $region21: #{encoding_c0.4} parent=11 // pred_check
          %p177 = pneg %p104
        $region22: #{encoding_c0.4} parent=11 // pred_check_branch
          %179 = sbr.rel (%p177) target = $region24
        $region23: #{encoding_c0.4} parent=11 // pred_region
          _
        $region24: #{encoding_c0.4} parent=11 // pred_fallthru
          _
      $region12: #{encoding_c0.4} parent=5 // pred_fallthru
        _
      %p180 = scmp.lt.s32.totalorder %s15, 2
      // Predicated region
      $region25: #{encoding_c0.4} parent=5 // pred_check
        %p181 = pneg %p180
      $region26: #{encoding_c0.4} parent=5 // pred_check_branch
        %183 = sbr.rel (%p181) target = $region28
      $region27: #{encoding_c0.4} parent=5 // pred_region
        // Predicated region
        $region29: #{encoding_c0.4} parent=27 // pred_check
          %p184 = pneg %p35
        $region30: #{encoding_c0.4} parent=27 // pred_check_branch
          %186 = sbr.rel (%p184) target = $region32
        $region31: #{encoding_c0.4} parent=27 // pred_region
          %s187 = smul.u32 8, %s15
          %p188 = scmp.lt.s32.totalorder %s187, 15
          %s189 = scalar_select %p188, %s187, 15
          %s190 = smul.addr %s189, 5
          %s191 = smul.addr %s190, 4
          %s192 = scalar_lea.vmem %s0, %s191
          %s193 = smul.u32 8, %s15
        $region32: #{encoding_c0.4} parent=27 // pred_fallthru
          _
      $region28: #{encoding_c0.4} parent=5 // pred_fallthru
        _
      %p194 = scmp.le.s32.totalorder 1, %s15
      %p195 = scmp.lt.s32.totalorder %s15, 3
      %p196 = pnand %p194, %p195
      %p197 = pneg %p196
      // Predicated region
      $region33: #{encoding_c0.4} parent=5 // pred_check
        _
      $region34: #{encoding_c0.4} parent=5 // pred_check_branch
        %199 = sbr.rel (%p196) target = $region36
      $region35: #{encoding_c0.4} parent=5 // pred_region
        %s200 = ssub.s32 %s15, 1
        %s201 = smul.u32 8, %s20
        %p202 = scmp.lt.s32.totalorder %s201, 15
        %s203 = scalar_select %p202, %s201, 15
        %s204 = smul.addr %s203, 5
        %s205 = smul.addr %s204, 4
        %s206 = scalar_lea.vmem %s0, %s205
        %p207 = pneg %p41
        %p208 = pneg %p38
        %p209 = pneg %p62
        %p210 = pneg %p59
        %p211 = pneg %p83
        %p212 = pneg %p80
        %p213 = pneg %p104
        %p214 = pneg %p101
        %p215 = pneg %p130
        %p216 = pneg %p127
        %s217 = sand.u32 %s117, 1
        %s218 = scalar_lea.sflag [#allocation3], %s217
        %s219 = sand.u32 %s117, 1
        %s220 = smul.addr %s219, 64
        %s221 = scalar_lea.vmem [#allocation2], %s220
        %p222 = pneg %p156
        %p223 = pneg %p153
        %s224 = smul.u32 2, %s20
        %p225 = scmp.lt.s32.totalorder %s224, 3
        %s226 = scalar_select %p225, %s224, 3
        %s227 = smul.addr %s226, 8
        %s228 = scalar_lea.vmem %s5, %s227
        %s229 = smul.u32 8, %s20
        %p230 = scmp.lt.s32.totalorder %s229, 15
        %s231 = scalar_select %p230, %s229, 15
        %s232 = smul.addr %s231, 5
        %s233 = smul.addr %s232, 4
        %s234 = scalar_lea.vmem %s0, %s233
        %s235 = smul.u32 8, %s20
        %s236 = smul.u32 8, %s20
        %s237 = smul.u32 2, %s20
        %p238 = scmp.lt.s32.totalorder %s237, 3
        %s239 = scalar_select %p238, %s237, 3
        %s240 = smul.addr %s239, 8
        %s241 = scalar_lea.vmem %s5, %s240
        %s242 = smul.u32 2, %s20
        %v244 = vld [vmem:[%s234] sm:$0xff]
        %v245 = vld [vmem:[%s234 + $0x8] sm:$0xff]
        %v246 = vld [vmem:[%s234 + $0x10] sm:$0xf]
        %v247 = vld [vmem:[%s234 + $0x14] sm:$0xff]
        %v248 = vld [vmem:[%s234 + $0x1c] sm:$0xff]
        %v249 = vld [vmem:[%s234 + $0x24] sm:$0xf]
        %v250 = vld [vmem:[%s234 + $0x28] sm:$0xff]
        %v251 = vld [vmem:[%s234 + $0x30] sm:$0xff]
        %v252 = vld [vmem:[%s234 + $0x38] sm:$0xf]
        %v253 = vld [vmem:[%s234 + $0x3c] sm:$0xff]
        %v254 = vld [vmem:[%s234 + $0x44] sm:$0xff]
        %v255 = vld [vmem:[%s234 + $0x4c] sm:$0xf]
        %v256 = vld [vmem:[%s234 + $0x50] sm:$0xff]
        %v257 = vld [vmem:[%s234 + $0x58] sm:$0xff]
        %v258 = vld [vmem:[%s234 + $0x60] sm:$0xf]
        %v259 = vld [vmem:[%s234 + $0x64] sm:$0xff]
        %v260 = vld [vmem:[%s234 + $0x6c] sm:$0xff]
        %v261 = vld [vmem:[%s234 + $0x74] sm:$0xf]
        %v262 = vld [vmem:[%s234 + $0x78] sm:$0xff]
        %v263 = vld [vmem:[%s234 + $0x80] sm:$0xff]
        %v264 = vld [vmem:[%s234 + $0x88] sm:$0xf]
        %v265 = vld [vmem:[%s234 + $0x8c] sm:$0xff]
        %v266 = vld [vmem:[%s234 + $0x94] sm:$0xff]
        %v267 = vld [vmem:[%s234 + $0x9c] sm:$0xf]
        %v268 = vld [vmem:[%s1] sm:$0xf]
        %v269 = vld [vmem:[%s1 + $0x4] sm:$0xf]
        %v270 = vld [vmem:[%s1 + $0x8] sm:$0xf]
        %v271 = vld [vmem:[%s1 + $0xc] sm:$0xf]
        %v272 = vld [vmem:[%s1 + $0x10] sm:$0xf]
        %v273 = vld [vmem:[%s1 + $0x14] sm:$0xf]
        %v274 = vld [vmem:[%s1 + $0x18] sm:$0xf]
        %v275 = vld [vmem:[%s1 + $0x1c] sm:$0xf]
        %v276 = vld [vmem:[%s1 + $0x20] sm:$0xf]
        %v277 = vld [vmem:[%s1 + $0x24] sm:$0xf]
        %v278 = vld [vmem:[%s1 + $0x28] sm:$0xf]
        %v279 = vld [vmem:[%s1 + $0x2c] sm:$0xf]
        %v280 = vld [vmem:[%s1 + $0x30] sm:$0xf]
        %v281 = vld [vmem:[%s1 + $0x34] sm:$0xf]
        %v282 = vld [vmem:[%s1 + $0x38] sm:$0xf]
        %v283 = vld [vmem:[%s1 + $0x3c] sm:$0xf]
        %v284 = vld [vmem:[%s1 + $0x40] sm:$0xf]
        %v285 = vld [vmem:[%s1 + $0x44] sm:$0xf]
        %v286 = vld [vmem:[%s1 + $0x48] sm:$0xf]
        %v287 = vld [vmem:[%s1 + $0x4c] sm:$0xf]
        %v288 = vld [vmem:[%s1 + $0x50] sm:$0xf]
        %v289 = vld [vmem:[%s1 + $0x54] sm:$0xf]
        %v290 = vld [vmem:[%s1 + $0x58] sm:$0xf]
        %v291 = vld [vmem:[%s1 + $0x5c] sm:$0xf]
        %v292 = vld [vmem:[%s1 + $0x60] sm:$0xf]
        %v293 = vld [vmem:[%s1 + $0x64] sm:$0xf]
        %v294 = vld [vmem:[%s1 + $0x68] sm:$0xf]
        %v295 = vld [vmem:[%s1 + $0x6c] sm:$0xf]
        %v296 = vld [vmem:[%s1 + $0x70] sm:$0xf]
        %v297 = vld [vmem:[%s1 + $0x74] sm:$0xf]
        %v298 = vld [vmem:[%s1 + $0x78] sm:$0xf]
        %v299 = vld [vmem:[%s1 + $0x7c] sm:$0xf]
        %v300 = vld [vmem:[%s1 + $0x80] sm:$0xf]
        %v301 = vld [vmem:[%s1 + $0x84] sm:$0xf]
        %v302 = vld [vmem:[%s1 + $0x88] sm:$0xf]
        %v303 = vld [vmem:[%s1 + $0x8c] sm:$0xf]
        %v304 = vld [vmem:[%s1 + $0x90] sm:$0xf]
        %v305 = vld [vmem:[%s1 + $0x94] sm:$0xf]
        %v306 = vld [vmem:[%s1 + $0x98] sm:$0xf]
        %v307 = vld [vmem:[%s1 + $0x9c] sm:$0xf]
        %v308 = vld [vmem:[%s1 + $0xa0] sm:$0xf]
        %v309 = vld [vmem:[%s1 + $0xa4] sm:$0xf]
        %v310 = vld [vmem:[%s1 + $0xa8] sm:$0xf]
        %v311 = vld [vmem:[%s1 + $0xac] sm:$0xf]
        %v312 = vld [vmem:[%s1 + $0xb0] sm:$0xf]
        %v313 = vld [vmem:[%s1 + $0xb4] sm:$0xf]
        %v314 = vld [vmem:[%s1 + $0xb8] sm:$0xf]
        %v315 = vld [vmem:[%s1 + $0xbc] sm:$0xf]
        %v316 = vld [vmem:[%s1 + $0xc0] sm:$0xf]
        %v317 = vld [vmem:[%s1 + $0xc4] sm:$0xf]
        %v318 = vld [vmem:[%s1 + $0xc8] sm:$0xf]
        %v319 = vld [vmem:[%s1 + $0xcc] sm:$0xf]
        %v320 = vld [vmem:[%s1 + $0xd0] sm:$0xf]
        %v321 = vld [vmem:[%s1 + $0xd4] sm:$0xf]
        %v322 = vld [vmem:[%s1 + $0xd8] sm:$0xf]
        %v323 = vld [vmem:[%s1 + $0xdc] sm:$0xf]
        %v324 = vld [vmem:[%s1 + $0xe0] sm:$0xf]
        %v325 = vld [vmem:[%s1 + $0xe4] sm:$0xf]
        %v326 = vld [vmem:[%s1 + $0xe8] sm:$0xf]
        %v327 = vld [vmem:[%s1 + $0xec] sm:$0xf]
        %v328 = vld [vmem:[%s1 + $0xf0] sm:$0xf]
        %v329 = vld [vmem:[%s1 + $0xf4] sm:$0xf]
        %v330 = vld [vmem:[%s1 + $0xf8] sm:$0xf]
        %v331 = vld [vmem:[%s1 + $0xfc] sm:$0xf]
        %v332 = vld [vmem:[%s1 + $0x100] sm:$0xf]
        %v333 = vld [vmem:[%s1 + $0x104] sm:$0xf]
        %v334 = vld [vmem:[%s1 + $0x108] sm:$0xf]
        %v335 = vld [vmem:[%s1 + $0x10c] sm:$0xf]
        %v336 = vld [vmem:[%s1 + $0x110] sm:$0xf]
        %v337 = vld [vmem:[%s1 + $0x114] sm:$0xf]
        %v338 = vld [vmem:[%s1 + $0x118] sm:$0xf]
        %v339 = vld [vmem:[%s1 + $0x11c] sm:$0xf]
        %v340 = vld [vmem:[%s2] sm:$0x1]
        %v342 = vperm.slane %v340, 0
        %v368 = vunpack.c.l.b16 %v244
        %v369 = vunpack.c.h.b16 %v244
        %v370 = vunpack.c.l.b16 %v245
        %v371 = vunpack.c.h.b16 %v245
        %v372 = vunpack.c.l.b16 %v246
        %v373 = vunpack.c.l.b16 %v247
        %v374 = vunpack.c.h.b16 %v247
        %v375 = vunpack.c.l.b16 %v248
        %v376 = vunpack.c.h.b16 %v248
        %v377 = vunpack.c.l.b16 %v249
        %v378 = vunpack.c.l.b16 %v250
        %v379 = vunpack.c.h.b16 %v250
        %v380 = vunpack.c.l.b16 %v251
        %v381 = vunpack.c.h.b16 %v251
        %v382 = vunpack.c.l.b16 %v252
        %v383 = vunpack.c.l.b16 %v253
        %v384 = vunpack.c.h.b16 %v253
        %v385 = vunpack.c.l.b16 %v254
        %v386 = vunpack.c.h.b16 %v254
        %v387 = vunpack.c.l.b16 %v255
        %v388 = vunpack.c.l.b16 %v256
        %v389 = vunpack.c.h.b16 %v256
        %v390 = vunpack.c.l.b16 %v257
        %v391 = vunpack.c.h.b16 %v257
        %v392 = vunpack.c.l.b16 %v258
        %v393 = vunpack.c.l.b16 %v259
        %v394 = vunpack.c.h.b16 %v259
        %v395 = vunpack.c.l.b16 %v260
        %v396 = vunpack.c.h.b16 %v260
        %v397 = vunpack.c.l.b16 %v261
        %v398 = vunpack.c.l.b16 %v262
        %v399 = vunpack.c.h.b16 %v262
        %v400 = vunpack.c.l.b16 %v263
        %v401 = vunpack.c.h.b16 %v263
        %v402 = vunpack.c.l.b16 %v264
        %v403 = vunpack.c.l.b16 %v265
        %v404 = vunpack.c.h.b16 %v265
        %v405 = vunpack.c.l.b16 %v266
        %v406 = vunpack.c.h.b16 %v266
        %v407 = vunpack.c.l.b16 %v267
        %v408 = vpack.c.b16 %v373, %v368
        %v409 = vpack.c.b16 %v374, %v369
        %v410 = vpack.c.b16 %v375, %v370
        %v411 = vpack.c.b16 %v376, %v371
        %v412 = vpack.c.b16 %v377, %v372
        %v413 = vpack.c.b16 %v383, %v378
        %v414 = vpack.c.b16 %v384, %v379
        %v415 = vpack.c.b16 %v385, %v380
        %v416 = vpack.c.b16 %v386, %v381
        %v417 = vpack.c.b16 %v387, %v382
        %v418 = vpack.c.b16 %v393, %v388
        %v419 = vpack.c.b16 %v394, %v389
        %v420 = vpack.c.b16 %v395, %v390
        %v421 = vpack.c.b16 %v396, %v391
        %v422 = vpack.c.b16 %v397, %v392
        %v423 = vpack.c.b16 %v403, %v398
        %v424 = vpack.c.b16 %v404, %v399
        %v425 = vpack.c.b16 %v405, %v400
        %v426 = vpack.c.b16 %v406, %v401
        %v427 = vpack.c.b16 %v407, %v402
        %v516 = vunpack.c.l.b16 %v268
        %v517 = vunpack.c.l.b16 %v269
        %v518 = vunpack.c.l.b16 %v270
        %v519 = vunpack.c.l.b16 %v271
        %v520 = vunpack.c.l.b16 %v272
        %v521 = vunpack.c.l.b16 %v273
        %v522 = vunpack.c.l.b16 %v274
        %v523 = vunpack.c.l.b16 %v275
        %v524 = vunpack.c.l.b16 %v276
        %v525 = vunpack.c.l.b16 %v277
        %v526 = vunpack.c.l.b16 %v278
        %v527 = vunpack.c.l.b16 %v279
        %v528 = vunpack.c.l.b16 %v280
        %v529 = vunpack.c.l.b16 %v281
        %v530 = vunpack.c.l.b16 %v282
        %v531 = vunpack.c.l.b16 %v283
        %v532 = vunpack.c.l.b16 %v284
        %v533 = vunpack.c.l.b16 %v285
        %v534 = vunpack.c.l.b16 %v286
        %v535 = vunpack.c.l.b16 %v287
        %v536 = vunpack.c.l.b16 %v288
        %v537 = vunpack.c.l.b16 %v289
        %v538 = vunpack.c.l.b16 %v290
        %v539 = vunpack.c.l.b16 %v291
        %v540 = vunpack.c.l.b16 %v292
        %v541 = vunpack.c.l.b16 %v293
        %v542 = vunpack.c.l.b16 %v294
        %v543 = vunpack.c.l.b16 %v295
        %v544 = vunpack.c.l.b16 %v296
        %v545 = vunpack.c.l.b16 %v297
        %v546 = vunpack.c.l.b16 %v298
        %v547 = vunpack.c.l.b16 %v299
        %v548 = vunpack.c.l.b16 %v300
        %v549 = vunpack.c.l.b16 %v301
        %v550 = vunpack.c.l.b16 %v302
        %v551 = vunpack.c.l.b16 %v303
        %v552 = vunpack.c.l.b16 %v304
        %v553 = vunpack.c.l.b16 %v305
        %v554 = vunpack.c.l.b16 %v306
        %v555 = vunpack.c.l.b16 %v307
        %v556 = vunpack.c.l.b16 %v308
        %v557 = vunpack.c.l.b16 %v309
        %v558 = vunpack.c.l.b16 %v310
        %v559 = vunpack.c.l.b16 %v311
        %v560 = vunpack.c.l.b16 %v312
        %v561 = vunpack.c.l.b16 %v313
        %v562 = vunpack.c.l.b16 %v314
        %v563 = vunpack.c.l.b16 %v315
        %v564 = vunpack.c.l.b16 %v316
        %v565 = vunpack.c.l.b16 %v317
        %v566 = vunpack.c.l.b16 %v318
        %v567 = vunpack.c.l.b16 %v319
        %v568 = vunpack.c.l.b16 %v320
        %v569 = vunpack.c.l.b16 %v321
        %v570 = vunpack.c.l.b16 %v322
        %v571 = vunpack.c.l.b16 %v323
        %v572 = vunpack.c.l.b16 %v324
        %v573 = vunpack.c.l.b16 %v325
        %v574 = vunpack.c.l.b16 %v326
        %v575 = vunpack.c.l.b16 %v327
        %v576 = vunpack.c.l.b16 %v328
        %v577 = vunpack.c.l.b16 %v329
        %v578 = vunpack.c.l.b16 %v330
        %v579 = vunpack.c.l.b16 %v331
        %v580 = vunpack.c.l.b16 %v332
        %v581 = vunpack.c.l.b16 %v333
        %v582 = vunpack.c.l.b16 %v334
        %v583 = vunpack.c.l.b16 %v335
        %v584 = vunpack.c.l.b16 %v336
        %v585 = vunpack.c.l.b16 %v337
        %v586 = vunpack.c.l.b16 %v338
        %v587 = vunpack.c.l.b16 %v339
        %v588 = vpack.c.b16 %v517, %v516
        %v589 = vpack.c.b16 %v519, %v518
        %v590 = vpack.c.b16 %v521, %v520
        %v591 = vpack.c.b16 %v523, %v522
        %v592 = vpack.c.b16 %v525, %v524
        %v593 = vpack.c.b16 %v527, %v526
        %v594 = vpack.c.b16 %v529, %v528
        %v595 = vpack.c.b16 %v531, %v530
        %v596 = vpack.c.b16 %v533, %v532
        %v597 = vpack.c.b16 %v535, %v534
        %v598 = vpack.c.b16 %v537, %v536
        %v599 = vpack.c.b16 %v539, %v538
        %v600 = vpack.c.b16 %v541, %v540
        %v601 = vpack.c.b16 %v543, %v542
        %v602 = vpack.c.b16 %v545, %v544
        %v603 = vpack.c.b16 %v547, %v546
        %v604 = vpack.c.b16 %v549, %v548
        %v605 = vpack.c.b16 %v551, %v550
        %v606 = vpack.c.b16 %v553, %v552
        %v607 = vpack.c.b16 %v555, %v554
        %v608 = vpack.c.b16 %v557, %v556
        %v609 = vpack.c.b16 %v559, %v558
        %v610 = vpack.c.b16 %v561, %v560
        %v611 = vpack.c.b16 %v563, %v562
        %v612 = vpack.c.b16 %v565, %v564
        %v613 = vpack.c.b16 %v567, %v566
        %v614 = vpack.c.b16 %v569, %v568
        %v615 = vpack.c.b16 %v571, %v570
        %v616 = vpack.c.b16 %v573, %v572
        %v617 = vpack.c.b16 %v575, %v574
        %v618 = vpack.c.b16 %v577, %v576
        %v619 = vpack.c.b16 %v579, %v578
        %v620 = vpack.c.b16 %v581, %v580
        %v621 = vpack.c.b16 %v583, %v582
        %v622 = vpack.c.b16 %v585, %v584
        %v623 = vpack.c.b16 %v587, %v586
        %vm660 = vcmask 523264
        %v662 = vsel %vm660, %v412, 0
        %v665 = vsel %vm660, %v417, 0
        %v668 = vsel %vm660, %v422, 0
        %v671 = vsel %vm660, %v427, 0
        %673 = vmatpush.bf16.msra.mxu0 %v595
        %674 = vmatpush.bf16.msra.mxu0 %v594
        %675 = vmatpush.bf16.msra.mxu0 %v593
        %676 = vmatpush.bf16.msra.mxu0 %v592
        %677 = vmatpush.bf16.msra.mxu0 %v591
        %678 = vmatpush.bf16.msra.mxu0 %v590
        %679 = vmatpush.bf16.msra.mxu0 %v589
        %680 = vmatpush.bf16.msra.mxu0 %v588
        %681 = vmatmul.bf16.gmra.mxu0 %v408
        %v682 = vpop.f32.mrf.mxu0
        %v683 = vadd.f32 %v342, %v682
        %v684 = vpop.f32.mrf.mxu0
        %v685 = vadd.f32 %v342, %v684
        %686 = vmatmul.bf16.gmra.mxu0 %v413
        %v687 = vpop.f32.mrf.mxu0
        %v688 = vadd.f32 %v342, %v687
        %v689 = vpop.f32.mrf.mxu0
        %v690 = vadd.f32 %v342, %v689
        %691 = vmatmul.bf16.gmra.mxu0 %v418
        %v692 = vpop.f32.mrf.mxu0
        %v693 = vadd.f32 %v342, %v692
        %v694 = vpop.f32.mrf.mxu0
        %v695 = vadd.f32 %v342, %v694
        %696 = vmatmul.bf16.gmra.mxu0 %v423
        %v697 = vpop.f32.mrf.mxu0
        %v698 = vadd.f32 %v342, %v697
        %v699 = vpop.f32.mrf.mxu0
        %v700 = vadd.f32 %v342, %v699
        %701 = vdwg.mxu0
        %702 = vmatpush.bf16.msra.mxu0 %v603
        %703 = vmatpush.bf16.msra.mxu0 %v602
        %704 = vmatpush.bf16.msra.mxu0 %v601
        %705 = vmatpush.bf16.msra.mxu0 %v600
        %706 = vmatpush.bf16.msra.mxu0 %v599
        %707 = vmatpush.bf16.msra.mxu0 %v598
        %708 = vmatpush.bf16.msra.mxu0 %v597
        %709 = vmatpush.bf16.msra.mxu0 %v596
        %710 = vmatmul.bf16.gmra.mxu0 %v409
        %v711 = vpop.f32.mrf.mxu0
        %v712 = vadd.f32 %v683, %v711
        %v713 = vpop.f32.mrf.mxu0
        %v714 = vadd.f32 %v685, %v713
        %715 = vmatmul.bf16.gmra.mxu0 %v414
        %v716 = vpop.f32.mrf.mxu0
        %v717 = vadd.f32 %v688, %v716
        %v718 = vpop.f32.mrf.mxu0
        %v719 = vadd.f32 %v690, %v718
        %720 = vmatmul.bf16.gmra.mxu0 %v419
        %v721 = vpop.f32.mrf.mxu0
        %v722 = vadd.f32 %v693, %v721
        %v723 = vpop.f32.mrf.mxu0
        %v724 = vadd.f32 %v695, %v723
        %725 = vmatmul.bf16.gmra.mxu0 %v424
        %v726 = vpop.f32.mrf.mxu0
        %v727 = vadd.f32 %v698, %v726
        %v728 = vpop.f32.mrf.mxu0
        %v729 = vadd.f32 %v700, %v728
        %730 = vdwg.mxu0
        %731 = vmatpush.bf16.msra.mxu0 %v611
        %732 = vmatpush.bf16.msra.mxu0 %v610
        %733 = vmatpush.bf16.msra.mxu0 %v609
        %734 = vmatpush.bf16.msra.mxu0 %v608
        %735 = vmatpush.bf16.msra.mxu0 %v607
        %736 = vmatpush.bf16.msra.mxu0 %v606
        %737 = vmatpush.bf16.msra.mxu0 %v605
        %738 = vmatpush.bf16.msra.mxu0 %v604
        %739 = vmatmul.bf16.gmra.mxu0 %v410
        %v740 = vpop.f32.mrf.mxu0
        %v741 = vadd.f32 %v712, %v740
        %v742 = vpop.f32.mrf.mxu0
        %v743 = vadd.f32 %v714, %v742
        %744 = vmatmul.bf16.gmra.mxu0 %v415
        %v745 = vpop.f32.mrf.mxu0
        %v746 = vadd.f32 %v717, %v745
        %v747 = vpop.f32.mrf.mxu0
        %v748 = vadd.f32 %v719, %v747
        %749 = vmatmul.bf16.gmra.mxu0 %v420
        %v750 = vpop.f32.mrf.mxu0
        %v751 = vadd.f32 %v722, %v750
        %v752 = vpop.f32.mrf.mxu0
        %v753 = vadd.f32 %v724, %v752
        %754 = vmatmul.bf16.gmra.mxu0 %v425
        %v755 = vpop.f32.mrf.mxu0
        %v756 = vadd.f32 %v727, %v755
        %v757 = vpop.f32.mrf.mxu0
        %v758 = vadd.f32 %v729, %v757
        %759 = vdwg.mxu0
        %760 = vmatpush.bf16.msra.mxu0 %v619
        %761 = vmatpush.bf16.msra.mxu0 %v618
        %762 = vmatpush.bf16.msra.mxu0 %v617
        %763 = vmatpush.bf16.msra.mxu0 %v616
        %764 = vmatpush.bf16.msra.mxu0 %v615
        %765 = vmatpush.bf16.msra.mxu0 %v614
        %766 = vmatpush.bf16.msra.mxu0 %v613
        %767 = vmatpush.bf16.msra.mxu0 %v612
        %768 = vmatmul.bf16.gmra.mxu0 %v411
        %v769 = vpop.f32.mrf.mxu0
        %v770 = vadd.f32 %v741, %v769
        %v771 = vpop.f32.mrf.mxu0
        %v772 = vadd.f32 %v743, %v771
        %773 = vmatmul.bf16.gmra.mxu0 %v416
        %v774 = vpop.f32.mrf.mxu0
        %v775 = vadd.f32 %v746, %v774
        %v776 = vpop.f32.mrf.mxu0
        %v777 = vadd.f32 %v748, %v776
        %778 = vmatmul.bf16.gmra.mxu0 %v421
        %v779 = vpop.f32.mrf.mxu0
        %v780 = vadd.f32 %v751, %v779
        %v781 = vpop.f32.mrf.mxu0
        %v782 = vadd.f32 %v753, %v781
        %783 = vmatmul.bf16.gmra.mxu0 %v426
        %v784 = vpop.f32.mrf.mxu0
        %v785 = vadd.f32 %v756, %v784
        %v786 = vpop.f32.mrf.mxu0
        %v787 = vadd.f32 %v758, %v786
        %788 = vdwg.mxu0
        %789 = vmatpush.bf16.msra.mxu0 0
        %790 = vmatpush.bf16.msra.mxu0 0
        %791 = vmatpush.bf16.msra.mxu0 0
        %792 = vmatpush.bf16.msra.mxu0 0
        %793 = vmatpush.bf16.msra.mxu0 %v623
        %794 = vmatpush.bf16.msra.mxu0 %v622
        %795 = vmatpush.bf16.msra.mxu0 %v621
        %796 = vmatpush.bf16.msra.mxu0 %v620
        %797 = vmatmul.bf16.gmra.mxu0 %v662
        %v798 = vpop.f32.mrf.mxu0
        %v799 = vadd.f32 %v770, %v798
        %v800 = vpop.f32.mrf.mxu0
        %v801 = vadd.f32 %v772, %v800
        %802 = vmatmul.bf16.gmra.mxu0 %v665
        %v803 = vpop.f32.mrf.mxu0
        %v804 = vadd.f32 %v775, %v803
        %v805 = vpop.f32.mrf.mxu0
        %v806 = vadd.f32 %v777, %v805
        %807 = vmatmul.bf16.gmra.mxu0 %v668
        %v808 = vpop.f32.mrf.mxu0
        %v809 = vadd.f32 %v780, %v808
        %v810 = vpop.f32.mrf.mxu0
        %v811 = vadd.f32 %v782, %v810
        %812 = vmatmul.bf16.gmra.mxu0 %v671
        %v813 = vpop.f32.mrf.mxu0
        %v814 = vadd.f32 %v785, %v813
        %v815 = vpop.f32.mrf.mxu0
        %v816 = vadd.f32 %v787, %v815
        %817 = vdwg.mxu0
        %v818 = vmax.f32 %v799, 0.0
        %v819 = vmax.f32 %v801, 0.0
        %v820 = vmax.f32 %v804, 0.0
        %v821 = vmax.f32 %v806, 0.0
        %v822 = vmax.f32 %v809, 0.0
        %v823 = vmax.f32 %v811, 0.0
        %v824 = vmax.f32 %v814, 0.0
        %v825 = vmax.f32 %v816, 0.0
        %826 = vst [vmem:[%s221] sm:$0xff] %v818
        %827 = vst [vmem:[%s221 + $0x8] sm:$0xff] %v819
        %828 = vst [vmem:[%s221 + $0x10] sm:$0xff] %v820
        %829 = vst [vmem:[%s221 + $0x18] sm:$0xff] %v821
        %830 = vst [vmem:[%s221 + $0x20] sm:$0xff] %v822
        %831 = vst [vmem:[%s221 + $0x28] sm:$0xff] %v823
        %832 = vst [vmem:[%s221 + $0x30] sm:$0xff] %v824
        %833 = vst [vmem:[%s221 + $0x38] sm:$0xff] %v825
        %v834 = vld [vmem:[%s3] sm:$0xf]
        %v835 = vld [vmem:[%s3 + $0x4] sm:$0xf]
        %v836 = vpack.c.bf16 %v819, %v818
        %v837 = vpack.c.bf16 %v821, %v820
        %v838 = vpack.c.bf16 %v823, %v822
        %v839 = vpack.c.bf16 %v825, %v824
        %v842 = vunpack.c.l.b16 %v834
        %v843 = vunpack.c.l.b16 %v835
        %v844 = vpack.c.b16 %v843, %v842
        %v846 = vsel %vm660, %v844, 0
        %848 = vmatpush.bf16.msra.mxu0 0
        %849 = vmatpush.bf16.msra.mxu0 0
        %850 = vmatpush.bf16.msra.mxu0 0
        %851 = vmatpush.bf16.msra.mxu0 0
        %852 = vmatpush.bf16.msra.mxu0 %v839
        %853 = vmatpush.bf16.msra.mxu0 %v838
        %854 = vmatpush.bf16.msra.mxu0 %v837
        %855 = vmatpush.bf16.msra.mxu0 %v836
        %856 = vmatmul.bf16.gmra.mxu0 %v846
        %v857 = vpop.f32.mrf.mxu0
        %v858 = vadd.f32 0.0, %v857
        %v859 = vpop.f32.mrf.mxu0
        %v860 = vadd.f32 0.0, %v859
        %861 = vdwg.mxu0
        %862 = vst [vmem:[%s241] sm:$0xff] %v858
        %863 = vst [vmem:[%s241 + $0x8] sm:$0xff] %v860
        %s864 = sand.u32 %s117, 1
        %s865 = scalar_lea.sflag [#allocation3], %s864
        %s866 = sand.u32 %s117, 1
        %s867 = smul.addr %s866, 64
        %s868 = scalar_lea.vmem [#allocation2], %s867
        %s869 = smul.u32 2, %s20
        %p870 = scmp.lt.s32.totalorder %s869, 3
        %s871 = scalar_select %p870, %s869, 3
        %s872 = smul.addr %s871, 8
        %s873 = scalar_lea.vmem %s5, %s872
        // Predicated region
        $region37: #{encoding_c0.4} parent=35 // pred_check
          %p874 = pneg %p127
        $region38: #{encoding_c0.4} parent=35 // pred_check_branch
          %876 = sbr.rel (%p874) target = $region40
        $region39: #{encoding_c0.4} parent=35 // pred_region
          %s877 = smul.u32 8, %s20
          %879 = vsyncadd %s865, 0
          %s880 = smul.addr %s877, 8
          %s881 = scalar_lea.hbm %s4, %s880
          %s882 = sshll.u32 %s868, 4
          %s883 = int_to_ptr.vmem [resolvable:$true] %s882
          %s884 = sshll.u32 %s881, 4
          %s885 = int_to_ptr.hbm [resolvable:$true] %s884
          %890 = dma.vmem_to_hbm [thread:$0]  %s883, 1024, %s885, %s865, 128, 128, 8
        $region40: #{encoding_c0.4} parent=35 // pred_fallthru
          _
        // Predicated region
        $region41: #{encoding_c0.4} parent=35 // pred_check
          %p891 = pneg %p153
        $region42: #{encoding_c0.4} parent=35 // pred_check_branch
          %893 = sbr.rel (%p891) target = $region44
        $region43: #{encoding_c0.4} parent=35 // pred_region
          %s894 = smul.u32 2, %s20
        $region44: #{encoding_c0.4} parent=35 // pred_fallthru
          _
      $region36: #{encoding_c0.4} parent=5 // pred_fallthru
        _
      %p895 = scmp.le.s32.totalorder 2, %s15
      // Predicated region
      $region45: #{encoding_c0.4} parent=5 // pred_check
        %p896 = pneg %p895
      $region46: #{encoding_c0.4} parent=5 // pred_check_branch
        %898 = sbr.rel (%p896) target = $region48
      $region47: #{encoding_c0.4} parent=5 // pred_region
        %s899 = ssub.s32 %s15, 2
        // Predicated region
        $region49: #{encoding_c0.4} parent=47 // pred_check
          %p900 = pneg %p133
        $region50: #{encoding_c0.4} parent=47 // pred_check_branch
          %902 = sbr.rel (%p900) target = $region52
        $region51: #{encoding_c0.4} parent=47 // pred_region
          %s903 = sand.u32 %s118, 1
          %s904 = scalar_lea.sflag [#allocation3], %s903
          %s905 = sand.u32 %s118, 1
          %s906 = smul.addr %s905, 64
          %s907 = scalar_lea.vmem [#allocation2], %s906
          %909 = dma.done %s904, 1024
        $region52: #{encoding_c0.4} parent=47 // pred_fallthru
          _
        // Predicated region
        $region53: #{encoding_c0.4} parent=47 // pred_check
          %p910 = pneg %p159
        $region54: #{encoding_c0.4} parent=47 // pred_check_branch
          %912 = sbr.rel (%p910) target = $region56
        $region55: #{encoding_c0.4} parent=47 // pred_region
          %s913 = smul.u32 2, %s21
          %p914 = scmp.lt.s32.totalorder %s913, 3
          %s915 = scalar_select %p914, %s913, 3
          %s916 = smul.addr %s915, 8
          %s917 = scalar_lea.vmem %s5, %s916
        $region56: #{encoding_c0.4} parent=47 // pred_fallthru
          _
      $region48: #{encoding_c0.4} parent=5 // pred_fallthru
        _
    $region6: #{encoding_c0.4} parent=1 // loop_footer
      %s19 = sadd.s32 1, %s15
    $region7: #{encoding_c0.4} parent=1 // loop_footer_branch
      %14 = sbr.rel target = $region3
    $region8: #{encoding_c0.4} parent=1 // loop_exit
      _
    %918 = vsyncpa [#allocation3], 1
    %s919 = scalar_lea.sflag [#allocation3], 1
    %920 = vsyncpa %s919, 1

// kernel: encoding_c0.5
$region0: #{encoding_c0.5}
  #allocation0 [shape = 'u32[]', space=smem, size = 0x4, offset = 0x4, fixed_abs, tag = 'smem constant byte address 0x4 - core index']
  #allocation1 [shape = 'u32[72,128]{1,0:T(1,128)}', space=vmem, size = 0x9000, scoped, tag = 'internal scratch']
  %s0 = inlined_call_operand.vmem [shape: bf16[32,1152], index: 0, kind: input, shape index: {}]
  %s1 = inlined_call_operand.vmem [shape: bf16[1152,128], index: 1, kind: input, shape index: {}]
  %s2 = inlined_call_operand.vmem [shape: f32[1,128], index: 2, kind: input, shape index: {}]
  %s3 = inlined_call_operand.hbm [shape: f32[32,128], index: 3, kind: output, shape index: {}]
  %s4 = sld [smem:[#allocation0]]
  $region45: #{encoding_c0.5} parent=0
    _
  %s6 = ssub.s32 1, %s4
  %s7 = scalar_select 0, %s6, %s4
  $region1: #{encoding_c0.5} parent=0
    #allocation2 [shape = 'u8[16384]{0}', space=vmem, size = 0x4000, scoped, tag = 'output window, operand 0']
    #allocation3 [shape = 's32[2]{0}', space=sflag, size = 0x8, scoped, tag = 'scoped memory for encoding_c0.5']
    %8 = vsyncpa [#allocation3], 0
    %s9 = scalar_lea.sflag [#allocation3], 1
    %10 = vsyncpa %s9, 0
    loop: start=0, step=1, limit=4
    $region2: #{encoding_c0.5} parent=1 // loop_pre_header
      _
    $region3: #{encoding_c0.5} parent=1 // loop_header
      %s12 = sphi 0, %s16
      %p13 = scmp.ge.s32.totalorder %s12, 4
      %s22 = sphi 0, %s24
      %s25 = sphi 0, %s22
      %s26 = sphi 0, %s25
      %s42 = sphi 0, %s26
      %s46 = sphi 0, %s46
      %s48 = sphi 0, %s46
      %s49 = sphi 0, %s48
      %s63 = sphi 0, %s49
      %s67 = sphi 0, %s67
      %s69 = sphi 0, %s67
      %s70 = sphi 0, %s69
      %s84 = sphi 0, %s70
      %s90 = sphi 0, %s92
      %s93 = sphi 0, %s90
      %s94 = sphi 0, %s93
      %s110 = sphi 0, %s94
    $region4: #{encoding_c0.5} parent=1 // loop_header_branch
      %15 = sbr.rel (%p13) target = $region8
    $region5: #{encoding_c0.5} parent=1 // loop_body
      %s17 = ssub.s32 %s12, 1
      %s18 = ssub.s32 %s12, 2
      %s19 = sadd.s32 %s12, 1
      %s20 = ssub.s32 %s12, %s19
      %p21 = scmp.eq.s32.totalorder %s20, 0
      %s23 = sadd.s32 %s22, 1
      %s24 = scalar_select %p21, %s22, %s23
      %p27 = pneg %p21
      %p28 = scmp.eq.s32.totalorder %s12, 1
      %p29 = por %p27, %p28
      %p30 = scmp.ne.s32.totalorder %s22, %s25
      %p31 = scmp.eq.s32.totalorder %s12, 0
      %p32 = por %p30, %p31
      %p33 = scmp.ne.s32.totalorder %s22, %s25
      %p34 = scmp.eq.s32.totalorder %s17, 1
      %p35 = por %p33, %p34
      %p36 = scmp.ne.s32.totalorder %s25, %s26
      %p37 = scmp.eq.s32.totalorder %s17, 0
      %p38 = por %p36, %p37
      %p39 = scmp.ne.s32.totalorder %s25, %s26
      %p40 = scmp.eq.s32.totalorder %s18, 1
      %p41 = por %p39, %p40
      %p43 = scmp.ne.s32.totalorder %s26, %s42
      %p44 = scmp.eq.s32.totalorder %s18, 0
      %p45 = por %p43, %p44
      %s47 = sadd.s32 %s46, 1
      %p50 = scmp.eq.s32.totalorder %s12, 1
      %p51 = scmp.ne.s32.totalorder %s46, %s48
      %p52 = scmp.eq.s32.totalorder %s12, 0
      %p53 = por %p51, %p52
      %p54 = scmp.ne.s32.totalorder %s46, %s48
      %p55 = scmp.eq.s32.totalorder %s17, 1
      %p56 = por %p54, %p55
      %p57 = scmp.ne.s32.totalorder %s48, %s49
      %p58 = scmp.eq.s32.totalorder %s17, 0
      %p59 = por %p57, %p58
      %p60 = scmp.ne.s32.totalorder %s48, %s49
      %p61 = scmp.eq.s32.totalorder %s18, 1
      %p62 = por %p60, %p61
      %p64 = scmp.ne.s32.totalorder %s49, %s63
      %p65 = scmp.eq.s32.totalorder %s18, 0
      %p66 = por %p64, %p65
      %s68 = sadd.s32 %s67, 1
      %p71 = scmp.eq.s32.totalorder %s12, 1
      %p72 = scmp.ne.s32.totalorder %s67, %s69
      %p73 = scmp.eq.s32.totalorder %s12, 0
      %p74 = por %p72, %p73
      %p75 = scmp.ne.s32.totalorder %s67, %s69
      %p76 = scmp.eq.s32.totalorder %s17, 1
      %p77 = por %p75, %p76
      %p78 = scmp.ne.s32.totalorder %s69, %s70
      %p79 = scmp.eq.s32.totalorder %s17, 0
      %p80 = por %p78, %p79
      %p81 = scmp.ne.s32.totalorder %s69, %s70
      %p82 = scmp.eq.s32.totalorder %s18, 1
      %p83 = por %p81, %p82
      %p85 = scmp.ne.s32.totalorder %s70, %s84
      %p86 = scmp.eq.s32.totalorder %s18, 0
      %p87 = por %p85, %p86
      %s88 = ssub.s32 %s12, %s19
      %p89 = scmp.eq.s32.totalorder %s88, 0
      %s91 = sadd.s32 %s90, 1
      %s92 = scalar_select %p89, %s90, %s91
      %p95 = pneg %p89
      %p96 = scmp.eq.s32.totalorder %s12, 1
      %p97 = por %p95, %p96
      %p98 = scmp.ne.s32.totalorder %s90, %s93
      %p99 = scmp.eq.s32.totalorder %s12, 0
      %p100 = por %p98, %p99
      %p101 = scmp.ne.s32.totalorder %s90, %s93
      %p102 = scmp.eq.s32.totalorder %s17, 1
      %p103 = por %p101, %p102
      %p104 = scmp.ne.s32.totalorder %s93, %s94
      %p105 = scmp.eq.s32.totalorder %s17, 0
      %p106 = por %p104, %p105
      %p107 = scmp.ne.s32.totalorder %s93, %s94
      %p108 = scmp.eq.s32.totalorder %s18, 1
      %p109 = por %p107, %p108
      %p111 = scmp.ne.s32.totalorder %s94, %s110
      %p112 = scmp.eq.s32.totalorder %s18, 0
      %p113 = por %p111, %p112
      %p114 = scmp.le.s32.totalorder 1, %s12
      %p115 = scmp.lt.s32.totalorder %s12, 3
      %p116 = pnand %p114, %p115
      %p117 = pneg %p116
      // Predicated region
      $region9: #{encoding_c0.5} parent=5 // pred_check
        _
      $region10: #{encoding_c0.5} parent=5 // pred_check_branch
        %119 = sbr.rel (%p116) target = $region12
      $region11: #{encoding_c0.5} parent=5 // pred_region
        %s120 = ssub.s32 %s12, 1
        // Predicated region
        $region13: #{encoding_c0.5} parent=11 // pred_check
          %p121 = pneg %p59
        $region14: #{encoding_c0.5} parent=11 // pred_check_branch
          %123 = sbr.rel (%p121) target = $region16
        $region15: #{encoding_c0.5} parent=11 // pred_region
          _
        $region16: #{encoding_c0.5} parent=11 // pred_fallthru
          _
        // Predicated region
        $region17: #{encoding_c0.5} parent=11 // pred_check
          %p124 = pneg %p80
        $region18: #{encoding_c0.5} parent=11 // pred_check_branch
          %126 = sbr.rel (%p124) target = $region20
        $region19: #{encoding_c0.5} parent=11 // pred_region
          _
        $region20: #{encoding_c0.5} parent=11 // pred_fallthru
          _
      $region12: #{encoding_c0.5} parent=5 // pred_fallthru
        _
      %p127 = scmp.lt.s32.totalorder %s12, 2
      // Predicated region
      $region21: #{encoding_c0.5} parent=5 // pred_check
        %p128 = pneg %p127
      $region22: #{encoding_c0.5} parent=5 // pred_check_branch
        %130 = sbr.rel (%p128) target = $region24
      $region23: #{encoding_c0.5} parent=5 // pred_region
        // Predicated region
        $region25: #{encoding_c0.5} parent=23 // pred_check
          %p131 = pneg %p32
        $region26: #{encoding_c0.5} parent=23 // pred_check_branch
          %133 = sbr.rel (%p131) target = $region28
        $region27: #{encoding_c0.5} parent=23 // pred_region
          %s134 = smul.u32 2, %s12
          %p135 = scmp.lt.s32.totalorder %s134, 3
          %s136 = scalar_select %p135, %s134, 3
          %s137 = smul.addr %s136, 9
          %s138 = smul.addr %s137, 4
          %s139 = scalar_lea.vmem %s0, %s138
          %s140 = smul.u32 2, %s12
        $region28: #{encoding_c0.5} parent=23 // pred_fallthru
          _
      $region24: #{encoding_c0.5} parent=5 // pred_fallthru
        _
      %p141 = scmp.le.s32.totalorder 1, %s12
      %p142 = scmp.lt.s32.totalorder %s12, 3
      %p143 = pnand %p141, %p142
      %p144 = pneg %p143
      // Predicated region
      $region29: #{encoding_c0.5} parent=5 // pred_check
        _
      $region30: #{encoding_c0.5} parent=5 // pred_check_branch
        %146 = sbr.rel (%p143) target = $region32
      $region31: #{encoding_c0.5} parent=5 // pred_region
        %s147 = ssub.s32 %s12, 1
        %s148 = smul.u32 2, %s17
        %p149 = scmp.lt.s32.totalorder %s148, 3
        %s150 = scalar_select %p149, %s148, 3
        %s151 = smul.addr %s150, 9
        %s152 = smul.addr %s151, 4
        %s153 = scalar_lea.vmem %s0, %s152
        %p154 = pneg %p38
        %p155 = pneg %p35
        %p156 = pneg %p59
        %p157 = pneg %p56
        %p158 = pneg %p80
        %p159 = pneg %p77
        %p160 = pneg %p106
        %p161 = pneg %p103
        %s162 = sand.u32 %s93, 1
        %s163 = scalar_lea.sflag [#allocation3], %s162
        %s164 = sand.u32 %s93, 1
        %s165 = smul.addr %s164, 16
        %s166 = scalar_lea.vmem [#allocation2], %s165
        %s167 = smul.u32 2, %s17
        %p168 = scmp.lt.s32.totalorder %s167, 3
        %s169 = scalar_select %p168, %s167, 3
        %s170 = smul.addr %s169, 9
        %s171 = smul.addr %s170, 4
        %s172 = scalar_lea.vmem %s0, %s171
        %s173 = smul.u32 2, %s17
        %s174 = smul.u32 2, %s17
        %v175 = vld [vmem:[%s172] sm:$0xff]
        %v176 = vld [vmem:[%s172 + $0x8] sm:$0xff]
        %v177 = vld [vmem:[%s172 + $0x10] sm:$0xff]
        %v178 = vld [vmem:[%s172 + $0x18] sm:$0xff]
        %v179 = vld [vmem:[%s172 + $0x20] sm:$0xf]
        %v180 = vld [vmem:[%s172 + $0x24] sm:$0xff]
        %v181 = vld [vmem:[%s172 + $0x2c] sm:$0xff]
        %v182 = vld [vmem:[%s172 + $0x34] sm:$0xff]
        %v183 = vld [vmem:[%s172 + $0x3c] sm:$0xff]
        %v184 = vld [vmem:[%s172 + $0x44] sm:$0xf]
        %v185 = vld [vmem:[%s1] sm:$0xf]
        %v186 = vld [vmem:[%s1 + $0x4] sm:$0xf]
        %v187 = vld [vmem:[%s1 + $0x8] sm:$0xf]
        %v188 = vld [vmem:[%s1 + $0xc] sm:$0xf]
        %v189 = vld [vmem:[%s1 + $0x10] sm:$0xf]
        %v190 = vld [vmem:[%s1 + $0x14] sm:$0xf]
        %v191 = vld [vmem:[%s1 + $0x18] sm:$0xf]
        %v192 = vld [vmem:[%s1 + $0x1c] sm:$0xf]
        %v193 = vld [vmem:[%s1 + $0x20] sm:$0xf]
        %v194 = vld [vmem:[%s1 + $0x24] sm:$0xf]
        %v195 = vld [vmem:[%s1 + $0x28] sm:$0xf]
        %v196 = vld [vmem:[%s1 + $0x2c] sm:$0xf]
        %v197 = vld [vmem:[%s1 + $0x30] sm:$0xf]
        %v198 = vld [vmem:[%s1 + $0x34] sm:$0xf]
        %v199 = vld [vmem:[%s1 + $0x38] sm:$0xf]
        %v200 = vld [vmem:[%s1 + $0x3c] sm:$0xf]
        %v201 = vld [vmem:[%s1 + $0x40] sm:$0xf]
        %v202 = vld [vmem:[%s1 + $0x44] sm:$0xf]
        %v203 = vld [vmem:[%s1 + $0x48] sm:$0xf]
        %v204 = vld [vmem:[%s1 + $0x4c] sm:$0xf]
        %v205 = vld [vmem:[%s1 + $0x50] sm:$0xf]
        %v206 = vld [vmem:[%s1 + $0x54] sm:$0xf]
        %v207 = vld [vmem:[%s1 + $0x58] sm:$0xf]
        %v208 = vld [vmem:[%s1 + $0x5c] sm:$0xf]
        %v209 = vld [vmem:[%s1 + $0x60] sm:$0xf]
        %v210 = vld [vmem:[%s1 + $0x64] sm:$0xf]
        %v211 = vld [vmem:[%s1 + $0x68] sm:$0xf]
        %v212 = vld [vmem:[%s1 + $0x6c] sm:$0xf]
        %v213 = vld [vmem:[%s1 + $0x70] sm:$0xf]
        %v214 = vld [vmem:[%s1 + $0x74] sm:$0xf]
        %v215 = vld [vmem:[%s1 + $0x78] sm:$0xf]
        %v216 = vld [vmem:[%s1 + $0x7c] sm:$0xf]
        %v217 = vld [vmem:[%s1 + $0x80] sm:$0xf]
        %v218 = vld [vmem:[%s1 + $0x84] sm:$0xf]
        %v219 = vld [vmem:[%s1 + $0x88] sm:$0xf]
        %v220 = vld [vmem:[%s1 + $0x8c] sm:$0xf]
        %v221 = vld [vmem:[%s1 + $0x90] sm:$0xf]
        %v222 = vld [vmem:[%s1 + $0x94] sm:$0xf]
        %v223 = vld [vmem:[%s1 + $0x98] sm:$0xf]
        %v224 = vld [vmem:[%s1 + $0x9c] sm:$0xf]
        %v225 = vld [vmem:[%s1 + $0xa0] sm:$0xf]
        %v226 = vld [vmem:[%s1 + $0xa4] sm:$0xf]
        %v227 = vld [vmem:[%s1 + $0xa8] sm:$0xf]
        %v228 = vld [vmem:[%s1 + $0xac] sm:$0xf]
        %v229 = vld [vmem:[%s1 + $0xb0] sm:$0xf]
        %v230 = vld [vmem:[%s1 + $0xb4] sm:$0xf]
        %v231 = vld [vmem:[%s1 + $0xb8] sm:$0xf]
        %v232 = vld [vmem:[%s1 + $0xbc] sm:$0xf]
        %v233 = vld [vmem:[%s1 + $0xc0] sm:$0xf]
        %v234 = vld [vmem:[%s1 + $0xc4] sm:$0xf]
        %v235 = vld [vmem:[%s1 + $0xc8] sm:$0xf]
        %v236 = vld [vmem:[%s1 + $0xcc] sm:$0xf]
        %v237 = vld [vmem:[%s1 + $0xd0] sm:$0xf]
        %v238 = vld [vmem:[%s1 + $0xd4] sm:$0xf]
        %v239 = vld [vmem:[%s1 + $0xd8] sm:$0xf]
        %v240 = vld [vmem:[%s1 + $0xdc] sm:$0xf]
        %v241 = vld [vmem:[%s1 + $0xe0] sm:$0xf]
        %v242 = vld [vmem:[%s1 + $0xe4] sm:$0xf]
        %v243 = vld [vmem:[%s1 + $0xe8] sm:$0xf]
        %v244 = vld [vmem:[%s1 + $0xec] sm:$0xf]
        %v245 = vld [vmem:[%s1 + $0xf0] sm:$0xf]
        %v246 = vld [vmem:[%s1 + $0xf4] sm:$0xf]
        %v247 = vld [vmem:[%s1 + $0xf8] sm:$0xf]
        %v248 = vld [vmem:[%s1 + $0xfc] sm:$0xf]
        %v249 = vld [vmem:[%s1 + $0x100] sm:$0xf]
        %v250 = vld [vmem:[%s1 + $0x104] sm:$0xf]
        %v251 = vld [vmem:[%s1 + $0x108] sm:$0xf]
        %v252 = vld [vmem:[%s1 + $0x10c] sm:$0xf]
        %v253 = vld [vmem:[%s1 + $0x110] sm:$0xf]
        %v254 = vld [vmem:[%s1 + $0x114] sm:$0xf]
        %v255 = vld [vmem:[%s1 + $0x118] sm:$0xf]
        %v256 = vld [vmem:[%s1 + $0x11c] sm:$0xf]
        %v257 = vld [vmem:[%s1 + $0x120] sm:$0xf]
        %v258 = vld [vmem:[%s1 + $0x124] sm:$0xf]
        %v259 = vld [vmem:[%s1 + $0x128] sm:$0xf]
        %v260 = vld [vmem:[%s1 + $0x12c] sm:$0xf]
        %v261 = vld [vmem:[%s1 + $0x130] sm:$0xf]
        %v262 = vld [vmem:[%s1 + $0x134] sm:$0xf]
        %v263 = vld [vmem:[%s1 + $0x138] sm:$0xf]
        %v264 = vld [vmem:[%s1 + $0x13c] sm:$0xf]
        %v265 = vld [vmem:[%s1 + $0x140] sm:$0xf]
        %v266 = vld [vmem:[%s1 + $0x144] sm:$0xf]
        %v267 = vld [vmem:[%s1 + $0x148] sm:$0xf]
        %v268 = vld [vmem:[%s1 + $0x14c] sm:$0xf]
        %v269 = vld [vmem:[%s1 + $0x150] sm:$0xf]
        %v270 = vld [vmem:[%s1 + $0x154] sm:$0xf]
        %v271 = vld [vmem:[%s1 + $0x158] sm:$0xf]
        %v272 = vld [vmem:[%s1 + $0x15c] sm:$0xf]
        %v273 = vld [vmem:[%s1 + $0x160] sm:$0xf]
        %v274 = vld [vmem:[%s1 + $0x164] sm:$0xf]
        %v275 = vld [vmem:[%s1 + $0x168] sm:$0xf]
        %v276 = vld [vmem:[%s1 + $0x16c] sm:$0xf]
        %v277 = vld [vmem:[%s1 + $0x170] sm:$0xf]
        %v278 = vld [vmem:[%s1 + $0x174] sm:$0xf]
        %v279 = vld [vmem:[%s1 + $0x178] sm:$0xf]
        %v280 = vld [vmem:[%s1 + $0x17c] sm:$0xf]
        %v281 = vld [vmem:[%s1 + $0x180] sm:$0xf]
        %v282 = vld [vmem:[%s1 + $0x184] sm:$0xf]
        %v283 = vld [vmem:[%s1 + $0x188] sm:$0xf]
        %v284 = vld [vmem:[%s1 + $0x18c] sm:$0xf]
        %v285 = vld [vmem:[%s1 + $0x190] sm:$0xf]
        %v286 = vld [vmem:[%s1 + $0x194] sm:$0xf]
        %v287 = vld [vmem:[%s1 + $0x198] sm:$0xf]
        %v288 = vld [vmem:[%s1 + $0x19c] sm:$0xf]
        %v289 = vld [vmem:[%s1 + $0x1a0] sm:$0xf]
        %v290 = vld [vmem:[%s1 + $0x1a4] sm:$0xf]
        %v291 = vld [vmem:[%s1 + $0x1a8] sm:$0xf]
        %v292 = vld [vmem:[%s1 + $0x1ac] sm:$0xf]
        %v293 = vld [vmem:[%s1 + $0x1b0] sm:$0xf]
        %v294 = vld [vmem:[%s1 + $0x1b4] sm:$0xf]
        %v295 = vld [vmem:[%s1 + $0x1b8] sm:$0xf]
        %v296 = vld [vmem:[%s1 + $0x1bc] sm:$0xf]
        %v297 = vld [vmem:[%s1 + $0x1c0] sm:$0xf]
        %v298 = vld [vmem:[%s1 + $0x1c4] sm:$0xf]
        %v299 = vld [vmem:[%s1 + $0x1c8] sm:$0xf]
        %v300 = vld [vmem:[%s1 + $0x1cc] sm:$0xf]
        %v301 = vld [vmem:[%s1 + $0x1d0] sm:$0xf]
        %v302 = vld [vmem:[%s1 + $0x1d4] sm:$0xf]
        %v303 = vld [vmem:[%s1 + $0x1d8] sm:$0xf]
        %v304 = vld [vmem:[%s1 + $0x1dc] sm:$0xf]
        %v305 = vld [vmem:[%s1 + $0x1e0] sm:$0xf]
        %v306 = vld [vmem:[%s1 + $0x1e4] sm:$0xf]
        %v307 = vld [vmem:[%s1 + $0x1e8] sm:$0xf]
        %v308 = vld [vmem:[%s1 + $0x1ec] sm:$0xf]
        %v309 = vld [vmem:[%s1 + $0x1f0] sm:$0xf]
        %v310 = vld [vmem:[%s1 + $0x1f4] sm:$0xf]
        %v311 = vld [vmem:[%s1 + $0x1f8] sm:$0xf]
        %v312 = vld [vmem:[%s1 + $0x1fc] sm:$0xf]
        %v313 = vld [vmem:[%s1 + $0x200] sm:$0xf]
        %v314 = vld [vmem:[%s1 + $0x204] sm:$0xf]
        %v315 = vld [vmem:[%s1 + $0x208] sm:$0xf]
        %v316 = vld [vmem:[%s1 + $0x20c] sm:$0xf]
        %v317 = vld [vmem:[%s1 + $0x210] sm:$0xf]
        %v318 = vld [vmem:[%s1 + $0x214] sm:$0xf]
        %v319 = vld [vmem:[%s1 + $0x218] sm:$0xf]
        %v320 = vld [vmem:[%s1 + $0x21c] sm:$0xf]
        %v321 = vld [vmem:[%s1 + $0x220] sm:$0xf]
        %v322 = vld [vmem:[%s1 + $0x224] sm:$0xf]
        %v323 = vld [vmem:[%s1 + $0x228] sm:$0xf]
        %v324 = vld [vmem:[%s1 + $0x22c] sm:$0xf]
        %v325 = vld [vmem:[%s1 + $0x230] sm:$0xf]
        %v326 = vld [vmem:[%s1 + $0x234] sm:$0xf]
        %v327 = vld [vmem:[%s1 + $0x238] sm:$0xf]
        %v328 = vld [vmem:[%s1 + $0x23c] sm:$0xf]
        %v329 = vld [vmem:[%s2] sm:$0x1]
        %v331 = vperm.slane %v329, 0
        %v343 = vunpack.c.l.b16 %v175
        %v344 = vunpack.c.h.b16 %v175
        %v345 = vunpack.c.l.b16 %v176
        %v346 = vunpack.c.h.b16 %v176
        %v347 = vunpack.c.l.b16 %v177
        %v348 = vunpack.c.h.b16 %v177
        %v349 = vunpack.c.l.b16 %v178
        %v350 = vunpack.c.h.b16 %v178
        %v351 = vunpack.c.l.b16 %v179
        %v352 = vunpack.c.l.b16 %v180
        %v353 = vunpack.c.h.b16 %v180
        %v354 = vunpack.c.l.b16 %v181
        %v355 = vunpack.c.h.b16 %v181
        %v356 = vunpack.c.l.b16 %v182
        %v357 = vunpack.c.h.b16 %v182
        %v358 = vunpack.c.l.b16 %v183
        %v359 = vunpack.c.h.b16 %v183
        %v360 = vunpack.c.l.b16 %v184
        %v361 = vpack.c.b16 %v352, %v343
        %v362 = vpack.c.b16 %v353, %v344
        %v363 = vpack.c.b16 %v354, %v345
        %v364 = vpack.c.b16 %v355, %v346
        %v365 = vpack.c.b16 %v356, %v347
        %v366 = vpack.c.b16 %v357, %v348
        %v367 = vpack.c.b16 %v358, %v349
        %v368 = vpack.c.b16 %v359, %v350
        %v369 = vpack.c.b16 %v360, %v351
        %v523 = vunpack.c.l.b16 %v185
        %v524 = vunpack.c.l.b16 %v186
        %v525 = vunpack.c.l.b16 %v187
        %v526 = vunpack.c.l.b16 %v188
        %v527 = vunpack.c.l.b16 %v189
        %v528 = vunpack.c.l.b16 %v190
        %v529 = vunpack.c.l.b16 %v191
        %v530 = vunpack.c.l.b16 %v192
        %v531 = vunpack.c.l.b16 %v193
        %v532 = vunpack.c.l.b16 %v194
        %v533 = vunpack.c.l.b16 %v195
        %v534 = vunpack.c.l.b16 %v196
        %v535 = vunpack.c.l.b16 %v197
        %v536 = vunpack.c.l.b16 %v198
        %v537 = vunpack.c.l.b16 %v199
        %v538 = vunpack.c.l.b16 %v200
        %v539 = vunpack.c.l.b16 %v201
        %v540 = vunpack.c.l.b16 %v202
        %v541 = vunpack.c.l.b16 %v203
        %v542 = vunpack.c.l.b16 %v204
        %v543 = vunpack.c.l.b16 %v205
        %v544 = vunpack.c.l.b16 %v206
        %v545 = vunpack.c.l.b16 %v207
        %v546 = vunpack.c.l.b16 %v208
        %v547 = vunpack.c.l.b16 %v209
        %v548 = vunpack.c.l.b16 %v210
        %v549 = vunpack.c.l.b16 %v211
        %v550 = vunpack.c.l.b16 %v212
        %v551 = vunpack.c.l.b16 %v213
        %v552 = vunpack.c.l.b16 %v214
        %v553 = vunpack.c.l.b16 %v215
        %v554 = vunpack.c.l.b16 %v216
        %v555 = vunpack.c.l.b16 %v217
        %v556 = vunpack.c.l.b16 %v218
        %v557 = vunpack.c.l.b16 %v219
        %v558 = vunpack.c.l.b16 %v220
        %v559 = vunpack.c.l.b16 %v221
        %v560 = vunpack.c.l.b16 %v222
        %v561 = vunpack.c.l.b16 %v223
        %v562 = vunpack.c.l.b16 %v224
        %v563 = vunpack.c.l.b16 %v225
        %v564 = vunpack.c.l.b16 %v226
        %v565 = vunpack.c.l.b16 %v227
        %v566 = vunpack.c.l.b16 %v228
        %v567 = vunpack.c.l.b16 %v229
        %v568 = vunpack.c.l.b16 %v230
        %v569 = vunpack.c.l.b16 %v231
        %v570 = vunpack.c.l.b16 %v232
        %v571 = vunpack.c.l.b16 %v233
        %v572 = vunpack.c.l.b16 %v234
        %v573 = vunpack.c.l.b16 %v235
        %v574 = vunpack.c.l.b16 %v236
        %v575 = vunpack.c.l.b16 %v237
        %v576 = vunpack.c.l.b16 %v238
        %v577 = vunpack.c.l.b16 %v239
        %v578 = vunpack.c.l.b16 %v240
        %v579 = vunpack.c.l.b16 %v241
        %v580 = vunpack.c.l.b16 %v242
        %v581 = vunpack.c.l.b16 %v243
        %v582 = vunpack.c.l.b16 %v244
        %v583 = vunpack.c.l.b16 %v245
        %v584 = vunpack.c.l.b16 %v246
        %v585 = vunpack.c.l.b16 %v247
        %v586 = vunpack.c.l.b16 %v248
        %v587 = vunpack.c.l.b16 %v249
        %v588 = vunpack.c.l.b16 %v250
        %v589 = vunpack.c.l.b16 %v251
        %v590 = vunpack.c.l.b16 %v252
        %v591 = vunpack.c.l.b16 %v253
        %v592 = vunpack.c.l.b16 %v254
        %v593 = vunpack.c.l.b16 %v255
        %v594 = vunpack.c.l.b16 %v256
        %v595 = vunpack.c.l.b16 %v257
        %v596 = vunpack.c.l.b16 %v258
        %v597 = vunpack.c.l.b16 %v259
        %v598 = vunpack.c.l.b16 %v260
        %v599 = vunpack.c.l.b16 %v261
        %v600 = vunpack.c.l.b16 %v262
        %v601 = vunpack.c.l.b16 %v263
        %v602 = vunpack.c.l.b16 %v264
        %v603 = vunpack.c.l.b16 %v265
        %v604 = vunpack.c.l.b16 %v266
        %v605 = vunpack.c.l.b16 %v267
        %v606 = vunpack.c.l.b16 %v268
        %v607 = vunpack.c.l.b16 %v269
        %v608 = vunpack.c.l.b16 %v270
        %v609 = vunpack.c.l.b16 %v271
        %v610 = vunpack.c.l.b16 %v272
        %v611 = vunpack.c.l.b16 %v273
        %v612 = vunpack.c.l.b16 %v274
        %v613 = vunpack.c.l.b16 %v275
        %v614 = vunpack.c.l.b16 %v276
        %v615 = vunpack.c.l.b16 %v277
        %v616 = vunpack.c.l.b16 %v278
        %v617 = vunpack.c.l.b16 %v279
        %v618 = vunpack.c.l.b16 %v280
        %v619 = vunpack.c.l.b16 %v281
        %v620 = vunpack.c.l.b16 %v282
        %v621 = vunpack.c.l.b16 %v283
        %v622 = vunpack.c.l.b16 %v284
        %v623 = vunpack.c.l.b16 %v285
        %v624 = vunpack.c.l.b16 %v286
        %v625 = vunpack.c.l.b16 %v287
        %v626 = vunpack.c.l.b16 %v288
        %v627 = vunpack.c.l.b16 %v289
        %v628 = vunpack.c.l.b16 %v290
        %v629 = vunpack.c.l.b16 %v291
        %v630 = vunpack.c.l.b16 %v292
        %v631 = vunpack.c.l.b16 %v293
        %v632 = vunpack.c.l.b16 %v294
        %v633 = vunpack.c.l.b16 %v295
        %v634 = vunpack.c.l.b16 %v296
        %v635 = vunpack.c.l.b16 %v297
        %v636 = vunpack.c.l.b16 %v298
        %v637 = vunpack.c.l.b16 %v299
        %v638 = vunpack.c.l.b16 %v300
        %v639 = vunpack.c.l.b16 %v301
        %v640 = vunpack.c.l.b16 %v302
        %v641 = vunpack.c.l.b16 %v303
        %v642 = vunpack.c.l.b16 %v304
        %v643 = vunpack.c.l.b16 %v305
        %v644 = vunpack.c.l.b16 %v306
        %v645 = vunpack.c.l.b16 %v307
        %v646 = vunpack.c.l.b16 %v308
        %v647 = vunpack.c.l.b16 %v309
        %v648 = vunpack.c.l.b16 %v310
        %v649 = vunpack.c.l.b16 %v311
        %v650 = vunpack.c.l.b16 %v312
        %v651 = vunpack.c.l.b16 %v313
        %v652 = vunpack.c.l.b16 %v314
        %v653 = vunpack.c.l.b16 %v315
        %v654 = vunpack.c.l.b16 %v316
        %v655 = vunpack.c.l.b16 %v317
        %v656 = vunpack.c.l.b16 %v318
        %v657 = vunpack.c.l.b16 %v319
        %v658 = vunpack.c.l.b16 %v320
        %v659 = vunpack.c.l.b16 %v321
        %v660 = vunpack.c.l.b16 %v322
        %v661 = vunpack.c.l.b16 %v323
        %v662 = vunpack.c.l.b16 %v324
        %v663 = vunpack.c.l.b16 %v325
        %v664 = vunpack.c.l.b16 %v326
        %v665 = vunpack.c.l.b16 %v327
        %v666 = vunpack.c.l.b16 %v328
        %v667 = vpack.c.b16 %v524, %v523
        %v668 = vpack.c.b16 %v526, %v525
        %v669 = vpack.c.b16 %v528, %v527
        %v670 = vpack.c.b16 %v530, %v529
        %v671 = vpack.c.b16 %v532, %v531
        %v672 = vpack.c.b16 %v534, %v533
        %v673 = vpack.c.b16 %v536, %v535
        %v674 = vpack.c.b16 %v538, %v537
        %v675 = vpack.c.b16 %v540, %v539
        %v676 = vpack.c.b16 %v542, %v541
        %v677 = vpack.c.b16 %v544, %v543
        %v678 = vpack.c.b16 %v546, %v545
        %v679 = vpack.c.b16 %v548, %v547
        %v680 = vpack.c.b16 %v550, %v549
        %v681 = vpack.c.b16 %v552, %v551
        %v682 = vpack.c.b16 %v554, %v553
        %v683 = vpack.c.b16 %v556, %v555
        %v684 = vpack.c.b16 %v558, %v557
        %v685 = vpack.c.b16 %v560, %v559
        %v686 = vpack.c.b16 %v562, %v561
        %v687 = vpack.c.b16 %v564, %v563
        %v688 = vpack.c.b16 %v566, %v565
        %v689 = vpack.c.b16 %v568, %v567
        %v690 = vpack.c.b16 %v570, %v569
        %v691 = vpack.c.b16 %v572, %v571
        %v692 = vpack.c.b16 %v574, %v573
        %v693 = vpack.c.b16 %v576, %v575
        %v694 = vpack.c.b16 %v578, %v577
        %v695 = vpack.c.b16 %v580, %v579
        %v696 = vpack.c.b16 %v582, %v581
        %v697 = vpack.c.b16 %v584, %v583
        %v698 = vpack.c.b16 %v586, %v585
        %v699 = vpack.c.b16 %v588, %v587
        %v700 = vpack.c.b16 %v590, %v589
        %v701 = vpack.c.b16 %v592, %v591
        %v702 = vpack.c.b16 %v594, %v593
        %v703 = vpack.c.b16 %v596, %v595
        %v704 = vpack.c.b16 %v598, %v597
        %v705 = vpack.c.b16 %v600, %v599
        %v706 = vpack.c.b16 %v602, %v601
        %v707 = vpack.c.b16 %v604, %v603
        %v708 = vpack.c.b16 %v606, %v605
        %v709 = vpack.c.b16 %v608, %v607
        %v710 = vpack.c.b16 %v610, %v609
        %v711 = vpack.c.b16 %v612, %v611
        %v712 = vpack.c.b16 %v614, %v613
        %v713 = vpack.c.b16 %v616, %v615
        %v714 = vpack.c.b16 %v618, %v617
        %v715 = vpack.c.b16 %v620, %v619
        %v716 = vpack.c.b16 %v622, %v621
        %v717 = vpack.c.b16 %v624, %v623
        %v718 = vpack.c.b16 %v626, %v625
        %v719 = vpack.c.b16 %v628, %v627
        %v720 = vpack.c.b16 %v630, %v629
        %v721 = vpack.c.b16 %v632, %v631
        %v722 = vpack.c.b16 %v634, %v633
        %v723 = vpack.c.b16 %v636, %v635
        %v724 = vpack.c.b16 %v638, %v637
        %v725 = vpack.c.b16 %v640, %v639
        %v726 = vpack.c.b16 %v642, %v641
        %v727 = vpack.c.b16 %v644, %v643
        %v728 = vpack.c.b16 %v646, %v645
        %v729 = vpack.c.b16 %v648, %v647
        %v730 = vpack.c.b16 %v650, %v649
        %v731 = vpack.c.b16 %v652, %v651
        %v732 = vpack.c.b16 %v654, %v653
        %v733 = vpack.c.b16 %v656, %v655
        %v734 = vpack.c.b16 %v658, %v657
        %v735 = vpack.c.b16 %v660, %v659
        %v736 = vpack.c.b16 %v662, %v661
        %v737 = vpack.c.b16 %v664, %v663
        %v738 = vpack.c.b16 %v666, %v665
        %811 = vmatpush.bf16.msra.mxu0 %v674
        %812 = vmatpush.bf16.msra.mxu0 %v673
        %813 = vmatpush.bf16.msra.mxu0 %v672
        %814 = vmatpush.bf16.msra.mxu0 %v671
        %815 = vmatpush.bf16.msra.mxu0 %v670
        %816 = vmatpush.bf16.msra.mxu0 %v669
        %817 = vmatpush.bf16.msra.mxu0 %v668
        %818 = vmatpush.bf16.msra.mxu0 %v667
        %819 = vmatmul.bf16.gmra.mxu0 %v361
        %v820 = vpop.f32.mrf.mxu0
        %v821 = vadd.f32 %v331, %v820
        %v822 = vpop.f32.mrf.mxu0
        %v823 = vadd.f32 %v331, %v822
        %824 = vdwg.mxu0
        %825 = vmatpush.bf16.msra.mxu0 %v682
        %826 = vmatpush.bf16.msra.mxu0 %v681
        %827 = vmatpush.bf16.msra.mxu0 %v680
        %828 = vmatpush.bf16.msra.mxu0 %v679
        %829 = vmatpush.bf16.msra.mxu0 %v678
        %830 = vmatpush.bf16.msra.mxu0 %v677
        %831 = vmatpush.bf16.msra.mxu0 %v676
        %832 = vmatpush.bf16.msra.mxu0 %v675
        %833 = vmatmul.bf16.gmra.mxu0 %v362
        %v834 = vpop.f32.mrf.mxu0
        %v835 = vadd.f32 %v821, %v834
        %v836 = vpop.f32.mrf.mxu0
        %v837 = vadd.f32 %v823, %v836
        %838 = vdwg.mxu0
        %839 = vmatpush.bf16.msra.mxu0 %v690
        %840 = vmatpush.bf16.msra.mxu0 %v689
        %841 = vmatpush.bf16.msra.mxu0 %v688
        %842 = vmatpush.bf16.msra.mxu0 %v687
        %843 = vmatpush.bf16.msra.mxu0 %v686
        %844 = vmatpush.bf16.msra.mxu0 %v685
        %845 = vmatpush.bf16.msra.mxu0 %v684
        %846 = vmatpush.bf16.msra.mxu0 %v683
        %847 = vmatmul.bf16.gmra.mxu0 %v363
        %v848 = vpop.f32.mrf.mxu0
        %v849 = vadd.f32 %v835, %v848
        %v850 = vpop.f32.mrf.mxu0
        %v851 = vadd.f32 %v837, %v850
        %852 = vdwg.mxu0
        %853 = vmatpush.bf16.msra.mxu0 %v698
        %854 = vmatpush.bf16.msra.mxu0 %v697
        %855 = vmatpush.bf16.msra.mxu0 %v696
        %856 = vmatpush.bf16.msra.mxu0 %v695
        %857 = vmatpush.bf16.msra.mxu0 %v694
        %858 = vmatpush.bf16.msra.mxu0 %v693
        %859 = vmatpush.bf16.msra.mxu0 %v692
        %860 = vmatpush.bf16.msra.mxu0 %v691
        %861 = vmatmul.bf16.gmra.mxu0 %v364
        %v862 = vpop.f32.mrf.mxu0
        %v863 = vadd.f32 %v849, %v862
        %v864 = vpop.f32.mrf.mxu0
        %v865 = vadd.f32 %v851, %v864
        %866 = vdwg.mxu0
        %867 = vmatpush.bf16.msra.mxu0 %v706
        %868 = vmatpush.bf16.msra.mxu0 %v705
        %869 = vmatpush.bf16.msra.mxu0 %v704
        %870 = vmatpush.bf16.msra.mxu0 %v703
        %871 = vmatpush.bf16.msra.mxu0 %v702
        %872 = vmatpush.bf16.msra.mxu0 %v701
        %873 = vmatpush.bf16.msra.mxu0 %v700
        %874 = vmatpush.bf16.msra.mxu0 %v699
        %875 = vmatmul.bf16.gmra.mxu0 %v365
        %v876 = vpop.f32.mrf.mxu0
        %v877 = vadd.f32 %v863, %v876
        %v878 = vpop.f32.mrf.mxu0
        %v879 = vadd.f32 %v865, %v878
        %880 = vdwg.mxu0
        %881 = vmatpush.bf16.msra.mxu0 %v714
        %882 = vmatpush.bf16.msra.mxu0 %v713
        %883 = vmatpush.bf16.msra.mxu0 %v712
        %884 = vmatpush.bf16.msra.mxu0 %v711
        %885 = vmatpush.bf16.msra.mxu0 %v710
        %886 = vmatpush.bf16.msra.mxu0 %v709
        %887 = vmatpush.bf16.msra.mxu0 %v708
        %888 = vmatpush.bf16.msra.mxu0 %v707
        %889 = vmatmul.bf16.gmra.mxu0 %v366
        %v890 = vpop.f32.mrf.mxu0
        %v891 = vadd.f32 %v877, %v890
        %v892 = vpop.f32.mrf.mxu0
        %v893 = vadd.f32 %v879, %v892
        %894 = vdwg.mxu0
        %895 = vmatpush.bf16.msra.mxu0 %v722
        %896 = vmatpush.bf16.msra.mxu0 %v721
        %897 = vmatpush.bf16.msra.mxu0 %v720
        %898 = vmatpush.bf16.msra.mxu0 %v719
        %899 = vmatpush.bf16.msra.mxu0 %v718
        %900 = vmatpush.bf16.msra.mxu0 %v717
        %901 = vmatpush.bf16.msra.mxu0 %v716
        %902 = vmatpush.bf16.msra.mxu0 %v715
        %903 = vmatmul.bf16.gmra.mxu0 %v367
        %v904 = vpop.f32.mrf.mxu0
        %v905 = vadd.f32 %v891, %v904
        %v906 = vpop.f32.mrf.mxu0
        %v907 = vadd.f32 %v893, %v906
        %908 = vdwg.mxu0
        %909 = vmatpush.bf16.msra.mxu0 %v730
        %910 = vmatpush.bf16.msra.mxu0 %v729
        %911 = vmatpush.bf16.msra.mxu0 %v728
        %912 = vmatpush.bf16.msra.mxu0 %v727
        %913 = vmatpush.bf16.msra.mxu0 %v726
        %914 = vmatpush.bf16.msra.mxu0 %v725
        %915 = vmatpush.bf16.msra.mxu0 %v724
        %916 = vmatpush.bf16.msra.mxu0 %v723
        %917 = vmatmul.bf16.gmra.mxu0 %v368
        %v918 = vpop.f32.mrf.mxu0
        %v919 = vadd.f32 %v905, %v918
        %v920 = vpop.f32.mrf.mxu0
        %v921 = vadd.f32 %v907, %v920
        %922 = vdwg.mxu0
        %923 = vmatpush.bf16.msra.mxu0 %v738
        %924 = vmatpush.bf16.msra.mxu0 %v737
        %925 = vmatpush.bf16.msra.mxu0 %v736
        %926 = vmatpush.bf16.msra.mxu0 %v735
        %927 = vmatpush.bf16.msra.mxu0 %v734
        %928 = vmatpush.bf16.msra.mxu0 %v733
        %929 = vmatpush.bf16.msra.mxu0 %v732
        %930 = vmatpush.bf16.msra.mxu0 %v731
        %931 = vmatmul.bf16.gmra.mxu0 %v369
        %v932 = vpop.f32.mrf.mxu0
        %v933 = vadd.f32 %v919, %v932
        %v934 = vpop.f32.mrf.mxu0
        %v935 = vadd.f32 %v921, %v934
        %936 = vdwg.mxu0
        %v937 = vmax.f32 %v933, 0.0
        %v938 = vmax.f32 %v935, 0.0
        %939 = vst [vmem:[%s166] sm:$0xff] %v937
        %940 = vst [vmem:[%s166 + $0x8] sm:$0xff] %v938
        %s941 = sand.u32 %s93, 1
        %s942 = scalar_lea.sflag [#allocation3], %s941
        %s943 = sand.u32 %s93, 1
        %s944 = smul.addr %s943, 16
        %s945 = scalar_lea.vmem [#allocation2], %s944
        // Predicated region
        $region33: #{encoding_c0.5} parent=31 // pred_check
          %p946 = pneg %p103
        $region34: #{encoding_c0.5} parent=31 // pred_check_branch
          %948 = sbr.rel (%p946) target = $region36
        $region35: #{encoding_c0.5} parent=31 // pred_region
          %s949 = smul.u32 2, %s17
          %951 = vsyncadd %s942, 0
          %s952 = smul.addr %s949, 8
          %s953 = scalar_lea.hbm %s3, %s952
          %s954 = sshll.u32 %s945, 4
          %s955 = int_to_ptr.vmem [resolvable:$true] %s954
          %s956 = sshll.u32 %s953, 4
          %s957 = int_to_ptr.hbm [resolvable:$true] %s956
          %962 = dma.vmem_to_hbm [thread:$0]  %s955, 256, %s957, %s942, 128, 128, 8
        $region36: #{encoding_c0.5} parent=31 // pred_fallthru
          _
      $region32: #{encoding_c0.5} parent=5 // pred_fallthru
        _
      %p963 = scmp.le.s32.totalorder 2, %s12
      // Predicated region
      $region37: #{encoding_c0.5} parent=5 // pred_check
        %p964 = pneg %p963
      $region38: #{encoding_c0.5} parent=5 // pred_check_branch
        %966 = sbr.rel (%p964) target = $region40
      $region39: #{encoding_c0.5} parent=5 // pred_region
        %s967 = ssub.s32 %s12, 2
        // Predicated region
        $region41: #{encoding_c0.5} parent=39 // pred_check
          %p968 = pneg %p109
        $region42: #{encoding_c0.5} parent=39 // pred_check_branch
          %970 = sbr.rel (%p968) target = $region44
        $region43: #{encoding_c0.5} parent=39 // pred_region
          %s971 = sand.u32 %s94, 1
          %s972 = scalar_lea.sflag [#allocation3], %s971
          %s973 = sand.u32 %s94, 1
          %s974 = smul.addr %s973, 16
          %s975 = scalar_lea.vmem [#allocation2], %s974
          %977 = dma.done %s972, 256
        $region44: #{encoding_c0.5} parent=39 // pred_fallthru
          _
      $region40: #{encoding_c0.5} parent=5 // pred_fallthru
        _
    $region6: #{encoding_c0.5} parent=1 // loop_footer
      %s16 = sadd.s32 1, %s12
    $region7: #{encoding_c0.5} parent=1 // loop_footer_branch
      %11 = sbr.rel target = $region3
    $region8: #{encoding_c0.5} parent=1 // loop_exit
      _
    %978 = vsyncpa [#allocation3], 1
    %s979 = scalar_lea.sflag [#allocation3], 1
    %980 = vsyncpa %s979, 1

</llo_original>
